<compile_context>
chip_gen: v5e
topology: v5e:2x2
jax: 0.10.0
libtpu: 0.0.40
codegen_flags: <defaults>
</compile_context>

<pallas_src>
import jax
import jax.numpy as jnp
from jax.experimental import pallas as pl
from jax.experimental.pallas import tpu as pltpu


# ---------------------------------------------------------------------------
# Fused Pallas kernel: all layers, both directions, phase fold + merge.
# ---------------------------------------------------------------------------
def make_fused_kernel(dilations, T, B):
    L = len(dilations)

    def kernel(*refs):
        # refs = [x_cat, (wih, whh, b_hoist, b_hn) * L, out_0..out_{L-1}, hT_0..hT_{L-1}]
        x_ref = refs[0]
        prm = refs[1:1 + 4 * L]
        out_refs = refs[1 + 4 * L:1 + 5 * L]
        hT_refs = refs[1 + 5 * L:1 + 6 * L]

        # Time-major, direction-folded input: (T, B, 2*I0)
        cur = x_ref[...]
        for l in range(L):
            wih = prm[4 * l][...]          # (2*I_l, 6*H_l)
            whh = prm[4 * l + 1][...]      # (2*H_l, 6*H_l)
            b_hoist = prm[4 * l + 2][...]  # (1, 6*H_l)  b_ih + [b_hh_r|b_hh_z|0]
            b_hn = prm[4 * l + 3][...]     # (1, 2*H_l)  b_hh_n (stays inside r*(.))
            d = dilations[l]
            H2 = whh.shape[0]              # 2*H
            H6 = whh.shape[1]              # 6*H
            T_sub = T // d
            R = d * B                      # dilation phases folded into batch
            Cin = cur.shape[-1]

            # Hoisted input projection for every time step at once (MXU).
            gi_all = jnp.dot(cur.reshape(T * B, Cin), wih,
                             preferred_element_type=jnp.float32) + b_hoist
            # row (t_sub*d + idx)*B + b  ->  [t_sub][idx*B + b]  (layout no-op)
            gi_steps = gi_all.reshape(T_sub, R, H6)

            out_ref = out_refs[l]
            h = jnp.zeros((R, H2), jnp.float32)
            # Static unroll (T_sub <= 8): only h@W_hh + gate math stay serial.
            for t in range(T_sub):
                gi = gi_steps[t]
                gh = jnp.dot(h, whh, preferred_element_type=jnp.float32)
                r = jax.nn.sigmoid(gi[:, :H2] + gh[:, :H2])
                z = jax.nn.sigmoid(gi[:, H2:2 * H2] + gh[:, H2:2 * H2])
                n = jnp.tanh(gi[:, 2 * H2:] + r * (gh[:, 2 * H2:] + b_hn))
                h = (1.0 - z) * n + z * h
                # Merge: original time t*d+idx <- phase idx row block.
                out_ref[t * d:(t + 1) * d, :, :] = h.reshape(d, B, H2)
            hT_refs[l][...] = h            # per-phase final hiddens (idx*B + b)
            # Next layer consumes the merged output straight from VMEM.
            cur = out_ref[...]

    return kernel


# ---------------------------------------------------------------------------
# Wrapper: one pallas_call for the whole bidirectional DRNN forward.
# ---------------------------------------------------------------------------
def bidirectional_drnn_forward(x, folded_params, dilations, hidden_sizes):
    B, T, _ = x.shape
    L = len(dilations)
    for d in dilations:
        assert T % d == 0  # fast-path restriction (see TODO above)

    # Direction fold: [fwd features | time-reversed features], time-major.
    x_tm = jnp.transpose(x, (1, 0, 2))                                 # (T, B, I)
    x_cat = jnp.concatenate([x_tm, jnp.flip(x_tm, axis=0)], axis=-1)   # (T, B, 2I)

    flat_inputs = [x_cat]
    for p in folded_params:
        flat_inputs += [p["wih"], p["whh"], p["b_hoist"], p["b_hn"]]

    out_shapes = tuple(
        jax.ShapeDtypeStruct((T, B, 2 * hidden_sizes[l]), jnp.float32)
        for l in range(L)
    ) + tuple(
        jax.ShapeDtypeStruct((dilations[l] * B, 2 * hidden_sizes[l]), jnp.float32)
        for l in range(L)
    )

    kernel = make_fused_kernel(tuple(dilations), T, B)
    results = pl.pallas_call(
        kernel,
        out_shape=out_shapes,
        in_specs=[pl.BlockSpec(memory_space=pltpu.MemorySpace.VMEM)
                  for _ in flat_inputs],
        out_specs=tuple(pl.BlockSpec(memory_space=pltpu.MemorySpace.VMEM)
                        for _ in out_shapes),
    )(*flat_inputs)
    merged_tm = results[:L]
    hTs = results[L:]

    combined, reg_hidden, bwd_hidden = [], [], []
    for l in range(L):
        H = hidden_sizes[l]
        d = dilations[l]
        m = merged_tm[l]                                   # (T, B, 2H), time-major
        fwd = jnp.transpose(m[:, :, :H], (1, 0, 2))        # (B, T, H)
        bwd = jnp.transpose(jnp.flip(m[:, :, H:], axis=0), (1, 0, 2))
        combined.append(jnp.concatenate([fwd, bwd], axis=2))
        hT = hTs[l].reshape(d, B, 2 * H)
        reg_hidden.append([hT[i, :, :H] for i in range(d)])
        bwd_hidden.append([hT[i, :, H:] for i in range(d)])
    return combined, reg_hidden + bwd_hidden


# ---------------------------------------------------------------------------
# Parameter init (nn.GRU shapes, transposed; gate order [r | z | n]) and the
# forward/backward -> block-diagonal direction fold.
# ---------------------------------------------------------------------------
def init_gru_params(key, n_in, n_hidden):
    k0, k1, k2, k3 = jax.random.split(key, 4)
    s = 1.0 / jnp.sqrt(jnp.float32(n_hidden))
    return {
        "wih": jax.random.uniform(k0, (n_in, 3 * n_hidden), jnp.float32, -s, s),
        "whh": jax.random.uniform(k1, (n_hidden, 3 * n_hidden), jnp.float32, -s, s),
        "bih": jax.random.uniform(k2, (1, 3 * n_hidden), jnp.float32, -s, s),
        "bhh": jax.random.uniform(k3, (1, 3 * n_hidden), jnp.float32, -s, s),
    }


def init_stack(key, n_input, n_hidden_list):
    params, n_in = [], n_input
    for h in n_hidden_list:
        key, sub = jax.random.split(key)
        params.append(init_gru_params(sub, n_in, h))
        n_in = h
    return params


def fold_direction_params(pf, pb):
    """Fuse fwd/bwd GRU params into per-gate block-diagonal weights.

    Column layout: gates [r | z | n], each gate block = [fwd H | bwd H].
    b_hoist folds b_ih plus b_hh for the r,z gates (they are plain additive);
    b_hn is kept separate (must stay inside r*(W_hn h + b_hn))."""
    H = pf["whh"].shape[0]

    def block_diag(wf, wb):
        zf = jnp.zeros((wf.shape[0], wb.shape[1]), wf.dtype)
        zb = jnp.zeros((wb.shape[0], wf.shape[1]), wb.dtype)
        return jnp.concatenate(
            [jnp.concatenate([wf, zf], axis=1),
             jnp.concatenate([zb, wb], axis=1)], axis=0)

    def fold_w(wf_full, wb_full):
        return jnp.concatenate(
            [block_diag(wf_full[:, g * H:(g + 1) * H],
                        wb_full[:, g * H:(g + 1) * H]) for g in range(3)],
            axis=1)                                   # (2*rows, 6H)

    def gate(b, g):
        return b[:, g * H:(g + 1) * H]

    b_hoist = jnp.concatenate([
        gate(pf["bih"], 0) + gate(pf["bhh"], 0),
        gate(pb["bih"], 0) + gate(pb["bhh"], 0),
        gate(pf["bih"], 1) + gate(pf["bhh"], 1),
        gate(pb["bih"], 1) + gate(pb["bhh"], 1),
        gate(pf["bih"], 2),
        gate(pb["bih"], 2),
    ], axis=1)                                        # (1, 6H)
    b_hn = jnp.concatenate([gate(pf["bhh"], 2), gate(pb["bhh"], 2)], axis=1)

    return {"wih": fold_w(pf["wih"], pb["wih"]),
            "whh": fold_w(pf["whh"], pb["whh"]),
            "b_hoist": b_hoist,
            "b_hn": b_hn}


# ---------------------------------------------------------------------------
# Pure-JAX reference (mirrors the PyTorch module structure) — correctness only.
# ---------------------------------------------------------------------------
def gru_ref(x_tm, h0, p):
    wih, whh, bih, bhh = p["wih"], p["whh"], p["bih"], p["bhh"]
    H = h0.shape[-1]

    def step(h, x_t):
        gi = x_t @ wih + bih
        gh = h @ whh + bhh
        r = jax.nn.sigmoid(gi[:, :H] + gh[:, :H])
        z = jax.nn.sigmoid(gi[:, H:2 * H] + gh[:, H:2 * H])
        n = jnp.tanh(gi[:, 2 * H:] + r * gh[:, 2 * H:])
        h_new = (1.0 - z) * n + z * h
        return h_new, h_new

    hT, outs = jax.lax.scan(step, h0, x_tm)
    return outs, hT


def drnn_forward_ref(x, layer_params, dilations):
    B, T, _ = x.shape
    rnn_inputs = x
    network_out, network_hidden = [], []
    for p, d in zip(layer_params, dilations):
        H = p["whh"].shape[0]
        outs, hiddens = [], []
        for idx in range(d):
            sub = rnn_inputs[:, idx::d, :]
            x_tm = jnp.transpose(sub, (1, 0, 2))
            out_tm, hT = gru_ref(x_tm, jnp.zeros((B, H), jnp.float32), p)
            outs.append(jnp.transpose(out_tm, (1, 0, 2)))
            hiddens.append(hT)
        rotation = T % d
        hiddens = hiddens[rotation:] + hiddens[:rotation]
        cols = [outs[t % d][:, t // d:t // d + 1, :] for t in range(T)]
        merged = jnp.concatenate(cols, axis=1)
        network_out.append(merged)
        network_hidden.append(hiddens)
        rnn_inputs = merged
    return network_out, network_hidden


def bidirectional_ref(x, fwd_params, bwd_params, dilations):
    reg_out, reg_hid = drnn_forward_ref(x, fwd_params, dilations)
    bwd_out, bwd_hid = drnn_forward_ref(jnp.flip(x, axis=1), bwd_params, dilations)
    bwd_out_rev = [jnp.flip(o, axis=1) for o in bwd_out]
    combined = [jnp.concatenate([r, b], axis=2)
                for r, b in zip(reg_out, bwd_out_rev)]
    return combined, reg_hid + bwd_hid


if __name__ == "__main__":
    key = jax.random.PRNGKey(0)
    B, T, n_input = 8, 8, 8
    n_hidden = [32, 32]
    dilations = [2 ** i for i in range(len(n_hidden))]   # default: [1, 2]

    kx, kf, kb = jax.random.split(key, 3)
    x = jax.random.normal(kx, (B, T, n_input), jnp.float32)

    fwd_params = init_stack(kf, n_input, n_hidden)   # regular DRNN
    bwd_params = init_stack(kb, n_input, n_hidden)   # backwards DRNN
    folded_params = [fold_direction_params(f, b)
                     for f, b in zip(fwd_params, bwd_params)]

    # TODO(synk): dropout arg of nn.GRU is a no-op for single-layer GRUs, so it
    # is intentionally not modeled.
    forward = jax.jit(lambda xx, pp: bidirectional_drnn_forward(
        xx, pp, tuple(dilations), tuple(n_hidden)))
    outs, hiddens = forward(x, folded_params)
    outs = [jax.block_until_ready(o) for o in outs]

    # Correctness check against a pure-JAX reference implementation.
    ref_outs, ref_hid = bidirectional_ref(x, fwd_params, bwd_params, dilations)
    for li, (o, r) in enumerate(zip(outs, ref_outs)):
        assert o.shape == r.shape == (B, T, 2 * n_hidden[li])
        assert jnp.allclose(o, r, atol=2e-5, rtol=2e-5)
    assert len(hiddens) == len(ref_hid)
    for hs, rhs in zip(hiddens, ref_hid):
        assert len(hs) == len(rhs)
        for a, b in zip(hs, rhs):
            assert a.shape == b.shape
            assert jnp.allclose(a, b, atol=2e-5, rtol=2e-5)

    print("KERNEL_OK")
</pallas_src>

<mosaic_0001>
module attributes {stable_mosaic.version = 11 : i64} {
  func.func @kernel(%arg0: memref<8x8x16xf32, #tpu.memory_space<vmem>>, %arg1: memref<16x192xf32, #tpu.memory_space<vmem>>, %arg2: memref<64x192xf32, #tpu.memory_space<vmem>>, %arg3: memref<1x192xf32, #tpu.memory_space<vmem>>, %arg4: memref<1x64xf32, #tpu.memory_space<vmem>>, %arg5: memref<64x192xf32, #tpu.memory_space<vmem>>, %arg6: memref<64x192xf32, #tpu.memory_space<vmem>>, %arg7: memref<1x192xf32, #tpu.memory_space<vmem>>, %arg8: memref<1x64xf32, #tpu.memory_space<vmem>>, %arg9: memref<8x8x64xf32, #tpu.memory_space<vmem>>, %arg10: memref<8x8x64xf32, #tpu.memory_space<vmem>>, %arg11: memref<8x64xf32, #tpu.memory_space<vmem>>, %arg12: memref<16x64xf32, #tpu.memory_space<vmem>>) attributes {dimension_semantics = [], scalar_prefetch = 0 : i64, scratch_operands = 0 : i64, tpu.core_type = #tpu.core_type<tc>} {
    %c0 = arith.constant 0 : index
    %c0_0 = arith.constant 0 : index
    %c0_1 = arith.constant 0 : index
    %0 = vector.load %arg0[%c0, %c0_0, %c0_1] : memref<8x8x16xf32, #tpu.memory_space<vmem>>, vector<8x8x16xf32>
    %c0_2 = arith.constant 0 : index
    %c0_3 = arith.constant 0 : index
    %1 = vector.load %arg1[%c0_2, %c0_3] : memref<16x192xf32, #tpu.memory_space<vmem>>, vector<16x192xf32>
    %c0_4 = arith.constant 0 : index
    %c0_5 = arith.constant 0 : index
    %2 = vector.load %arg2[%c0_4, %c0_5] : memref<64x192xf32, #tpu.memory_space<vmem>>, vector<64x192xf32>
    %c0_6 = arith.constant 0 : index
    %c0_7 = arith.constant 0 : index
    %3 = vector.load %arg3[%c0_6, %c0_7] : memref<1x192xf32, #tpu.memory_space<vmem>>, vector<1x192xf32>
    %c0_8 = arith.constant 0 : index
    %c0_9 = arith.constant 0 : index
    %4 = vector.load %arg4[%c0_8, %c0_9] : memref<1x64xf32, #tpu.memory_space<vmem>>, vector<1x64xf32>
    %5 = vector.shape_cast %0 : vector<8x8x16xf32> to vector<64x16xf32>
    %cst = arith.constant dense<0.000000e+00> : vector<64x192xf32>
    %6 = tpu.matmul %5, %1, %cst {dimension_numbers = #tpu.dot_dimension_numbers<[1], [0], [0], [1], [0, 0, 1, 1], [], []>} : vector<64x16xf32>, vector<16x192xf32>, vector<64x192xf32> -> vector<64x192xf32>
    %7 = vector.broadcast %3 : vector<1x192xf32> to vector<64x192xf32>
    %8 = arith.addf %6, %7 : vector<64x192xf32>
    %9 = vector.shape_cast %8 : vector<64x192xf32> to vector<8x8x192xf32>
    %cst_10 = arith.constant 0.000000e+00 : f32
    %10 = vector.broadcast %cst_10 : f32 to vector<8x64xf32>
    %11 = vector.extract_strided_slice %9 {offsets = [0, 0, 0], sizes = [1, 8, 192], strides = [1, 1, 1]} : vector<8x8x192xf32> to vector<1x8x192xf32>
    %12 = vector.shape_cast %11 : vector<1x8x192xf32> to vector<8x192xf32>
    %cst_11 = arith.constant dense<0.000000e+00> : vector<8x192xf32>
    %13 = tpu.matmul %10, %2, %cst_11 {dimension_numbers = #tpu.dot_dimension_numbers<[1], [0], [0], [1], [0, 0, 1, 1], [], []>} : vector<8x64xf32>, vector<64x192xf32>, vector<8x192xf32> -> vector<8x192xf32>
    %14 = vector.extract_strided_slice %12 {offsets = [0, 0], sizes = [8, 64], strides = [1, 1]} : vector<8x192xf32> to vector<8x64xf32>
    %15 = vector.extract_strided_slice %13 {offsets = [0, 0], sizes = [8, 64], strides = [1, 1]} : vector<8x192xf32> to vector<8x64xf32>
    %16 = arith.addf %14, %15 : vector<8x64xf32>
    %17 = arith.negf %16 : vector<8x64xf32>
    %18 = math.exp %17 : vector<8x64xf32>
    %cst_12 = arith.constant 1.000000e+00 : f32
    %19 = vector.broadcast %cst_12 : f32 to vector<8x64xf32>
    %20 = arith.addf %19, %18 : vector<8x64xf32>
    %21 = arith.divf %19, %20 : vector<8x64xf32>
    %22 = vector.extract_strided_slice %12 {offsets = [0, 64], sizes = [8, 64], strides = [1, 1]} : vector<8x192xf32> to vector<8x64xf32>
    %23 = vector.extract_strided_slice %13 {offsets = [0, 64], sizes = [8, 64], strides = [1, 1]} : vector<8x192xf32> to vector<8x64xf32>
    %24 = arith.addf %22, %23 : vector<8x64xf32>
    %25 = arith.negf %24 : vector<8x64xf32>
    %26 = math.exp %25 : vector<8x64xf32>
    %cst_13 = arith.constant 1.000000e+00 : f32
    %27 = vector.broadcast %cst_13 : f32 to vector<8x64xf32>
    %28 = arith.addf %27, %26 : vector<8x64xf32>
    %29 = arith.divf %27, %28 : vector<8x64xf32>
    %30 = vector.extract_strided_slice %12 {offsets = [0, 128], sizes = [8, 64], strides = [1, 1]} : vector<8x192xf32> to vector<8x64xf32>
    %31 = vector.extract_strided_slice %13 {offsets = [0, 128], sizes = [8, 64], strides = [1, 1]} : vector<8x192xf32> to vector<8x64xf32>
    %32 = vector.broadcast %4 : vector<1x64xf32> to vector<8x64xf32>
    %33 = arith.addf %31, %32 : vector<8x64xf32>
    %34 = arith.mulf %21, %33 : vector<8x64xf32>
    %35 = arith.addf %30, %34 : vector<8x64xf32>
    %36 = math.tanh %35 : vector<8x64xf32>
    %cst_14 = arith.constant 1.000000e+00 : f32
    %37 = vector.broadcast %cst_14 : f32 to vector<8x64xf32>
    %38 = arith.subf %37, %29 : vector<8x64xf32>
    %39 = arith.mulf %38, %36 : vector<8x64xf32>
    %40 = arith.mulf %29, %10 : vector<8x64xf32>
    %41 = arith.addf %39, %40 : vector<8x64xf32>
    %42 = vector.shape_cast %41 : vector<8x64xf32> to vector<1x8x64xf32>
    %c0_15 = arith.constant 0 : index
    %c0_16 = arith.constant 0 : index
    %c0_17 = arith.constant 0 : index
    %43 = vector.load %arg9[%c0_15, %c0_16, %c0_17] : memref<8x8x64xf32, #tpu.memory_space<vmem>>, vector<1x8x64xf32>
    tpu.vector_store %arg9[%c0_15, %c0_16, %c0_17], %42 {strides = array<i32>} : memref<8x8x64xf32, #tpu.memory_space<vmem>>, vector<1x8x64xf32>,
    %44 = vector.extract_strided_slice %9 {offsets = [1, 0, 0], sizes = [1, 8, 192], strides = [1, 1, 1]} : vector<8x8x192xf32> to vector<1x8x192xf32>
    %45 = vector.shape_cast %44 : vector<1x8x192xf32> to vector<8x192xf32>
    %cst_18 = arith.constant dense<0.000000e+00> : vector<8x192xf32>
    %46 = tpu.matmul %41, %2, %cst_18 {dimension_numbers = #tpu.dot_dimension_numbers<[1], [0], [0], [1], [0, 0, 1, 1], [], []>} : vector<8x64xf32>, vector<64x192xf32>, vector<8x192xf32> -> vector<8x192xf32>
    %47 = vector.extract_strided_slice %45 {offsets = [0, 0], sizes = [8, 64], strides = [1, 1]} : vector<8x192xf32> to vector<8x64xf32>
    %48 = vector.extract_strided_slice %46 {offsets = [0, 0], sizes = [8, 64], strides = [1, 1]} : vector<8x192xf32> to vector<8x64xf32>
    %49 = arith.addf %47, %48 : vector<8x64xf32>
    %50 = arith.negf %49 : vector<8x64xf32>
    %51 = math.exp %50 : vector<8x64xf32>
    %cst_19 = arith.constant 1.000000e+00 : f32
    %52 = vector.broadcast %cst_19 : f32 to vector<8x64xf32>
    %53 = arith.addf %52, %51 : vector<8x64xf32>
    %54 = arith.divf %52, %53 : vector<8x64xf32>
    %55 = vector.extract_strided_slice %45 {offsets = [0, 64], sizes = [8, 64], strides = [1, 1]} : vector<8x192xf32> to vector<8x64xf32>
    %56 = vector.extract_strided_slice %46 {offsets = [0, 64], sizes = [8, 64], strides = [1, 1]} : vector<8x192xf32> to vector<8x64xf32>
    %57 = arith.addf %55, %56 : vector<8x64xf32>
    %58 = arith.negf %57 : vector<8x64xf32>
    %59 = math.exp %58 : vector<8x64xf32>
    %cst_20 = arith.constant 1.000000e+00 : f32
    %60 = vector.broadcast %cst_20 : f32 to vector<8x64xf32>
    %61 = arith.addf %60, %59 : vector<8x64xf32>
    %62 = arith.divf %60, %61 : vector<8x64xf32>
    %63 = vector.extract_strided_slice %45 {offsets = [0, 128], sizes = [8, 64], strides = [1, 1]} : vector<8x192xf32> to vector<8x64xf32>
    %64 = vector.extract_strided_slice %46 {offsets = [0, 128], sizes = [8, 64], strides = [1, 1]} : vector<8x192xf32> to vector<8x64xf32>
    %65 = vector.broadcast %4 : vector<1x64xf32> to vector<8x64xf32>
    %66 = arith.addf %64, %65 : vector<8x64xf32>
    %67 = arith.mulf %54, %66 : vector<8x64xf32>
    %68 = arith.addf %63, %67 : vector<8x64xf32>
    %69 = math.tanh %68 : vector<8x64xf32>
    %cst_21 = arith.constant 1.000000e+00 : f32
    %70 = vector.broadcast %cst_21 : f32 to vector<8x64xf32>
    %71 = arith.subf %70, %62 : vector<8x64xf32>
    %72 = arith.mulf %71, %69 : vector<8x64xf32>
    %73 = arith.mulf %62, %41 : vector<8x64xf32>
    %74 = arith.addf %72, %73 : vector<8x64xf32>
    %75 = vector.shape_cast %74 : vector<8x64xf32> to vector<1x8x64xf32>
    %c1 = arith.constant 1 : index
    %c0_22 = arith.constant 0 : index
    %c0_23 = arith.constant 0 : index
    %76 = vector.load %arg9[%c1, %c0_22, %c0_23] : memref<8x8x64xf32, #tpu.memory_space<vmem>>, vector<1x8x64xf32>
    tpu.vector_store %arg9[%c1, %c0_22, %c0_23], %75 {strides = array<i32>} : memref<8x8x64xf32, #tpu.memory_space<vmem>>, vector<1x8x64xf32>,
    %77 = vector.extract_strided_slice %9 {offsets = [2, 0, 0], sizes = [1, 8, 192], strides = [1, 1, 1]} : vector<8x8x192xf32> to vector<1x8x192xf32>
    %78 = vector.shape_cast %77 : vector<1x8x192xf32> to vector<8x192xf32>
    %cst_24 = arith.constant dense<0.000000e+00> : vector<8x192xf32>
    %79 = tpu.matmul %74, %2, %cst_24 {dimension_numbers = #tpu.dot_dimension_numbers<[1], [0], [0], [1], [0, 0, 1, 1], [], []>} : vector<8x64xf32>, vector<64x192xf32>, vector<8x192xf32> -> vector<8x192xf32>
    %80 = vector.extract_strided_slice %78 {offsets = [0, 0], sizes = [8, 64], strides = [1, 1]} : vector<8x192xf32> to vector<8x64xf32>
    %81 = vector.extract_strided_slice %79 {offsets = [0, 0], sizes = [8, 64], strides = [1, 1]} : vector<8x192xf32> to vector<8x64xf32>
    %82 = arith.addf %80, %81 : vector<8x64xf32>
    %83 = arith.negf %82 : vector<8x64xf32>
    %84 = math.exp %83 : vector<8x64xf32>
    %cst_25 = arith.constant 1.000000e+00 : f32
    %85 = vector.broadcast %cst_25 : f32 to vector<8x64xf32>
    %86 = arith.addf %85, %84 : vector<8x64xf32>
    %87 = arith.divf %85, %86 : vector<8x64xf32>
    %88 = vector.extract_strided_slice %78 {offsets = [0, 64], sizes = [8, 64], strides = [1, 1]} : vector<8x192xf32> to vector<8x64xf32>
    %89 = vector.extract_strided_slice %79 {offsets = [0, 64], sizes = [8, 64], strides = [1, 1]} : vector<8x192xf32> to vector<8x64xf32>
    %90 = arith.addf %88, %89 : vector<8x64xf32>
    %91 = arith.negf %90 : vector<8x64xf32>
    %92 = math.exp %91 : vector<8x64xf32>
    %cst_26 = arith.constant 1.000000e+00 : f32
    %93 = vector.broadcast %cst_26 : f32 to vector<8x64xf32>
    %94 = arith.addf %93, %92 : vector<8x64xf32>
    %95 = arith.divf %93, %94 : vector<8x64xf32>
    %96 = vector.extract_strided_slice %78 {offsets = [0, 128], sizes = [8, 64], strides = [1, 1]} : vector<8x192xf32> to vector<8x64xf32>
    %97 = vector.extract_strided_slice %79 {offsets = [0, 128], sizes = [8, 64], strides = [1, 1]} : vector<8x192xf32> to vector<8x64xf32>
    %98 = vector.broadcast %4 : vector<1x64xf32> to vector<8x64xf32>
    %99 = arith.addf %97, %98 : vector<8x64xf32>
    %100 = arith.mulf %87, %99 : vector<8x64xf32>
    %101 = arith.addf %96, %100 : vector<8x64xf32>
    %102 = math.tanh %101 : vector<8x64xf32>
    %cst_27 = arith.constant 1.000000e+00 : f32
    %103 = vector.broadcast %cst_27 : f32 to vector<8x64xf32>
    %104 = arith.subf %103, %95 : vector<8x64xf32>
    %105 = arith.mulf %104, %102 : vector<8x64xf32>
    %106 = arith.mulf %95, %74 : vector<8x64xf32>
    %107 = arith.addf %105, %106 : vector<8x64xf32>
    %108 = vector.shape_cast %107 : vector<8x64xf32> to vector<1x8x64xf32>
    %c2 = arith.constant 2 : index
    %c0_28 = arith.constant 0 : index
    %c0_29 = arith.constant 0 : index
    %109 = vector.load %arg9[%c2, %c0_28, %c0_29] : memref<8x8x64xf32, #tpu.memory_space<vmem>>, vector<1x8x64xf32>
    tpu.vector_store %arg9[%c2, %c0_28, %c0_29], %108 {strides = array<i32>} : memref<8x8x64xf32, #tpu.memory_space<vmem>>, vector<1x8x64xf32>,
    %110 = vector.extract_strided_slice %9 {offsets = [3, 0, 0], sizes = [1, 8, 192], strides = [1, 1, 1]} : vector<8x8x192xf32> to vector<1x8x192xf32>
    %111 = vector.shape_cast %110 : vector<1x8x192xf32> to vector<8x192xf32>
    %cst_30 = arith.constant dense<0.000000e+00> : vector<8x192xf32>
    %112 = tpu.matmul %107, %2, %cst_30 {dimension_numbers = #tpu.dot_dimension_numbers<[1], [0], [0], [1], [0, 0, 1, 1], [], []>} : vector<8x64xf32>, vector<64x192xf32>, vector<8x192xf32> -> vector<8x192xf32>
    %113 = vector.extract_strided_slice %111 {offsets = [0, 0], sizes = [8, 64], strides = [1, 1]} : vector<8x192xf32> to vector<8x64xf32>
    %114 = vector.extract_strided_slice %112 {offsets = [0, 0], sizes = [8, 64], strides = [1, 1]} : vector<8x192xf32> to vector<8x64xf32>
    %115 = arith.addf %113, %114 : vector<8x64xf32>
    %116 = arith.negf %115 : vector<8x64xf32>
    %117 = math.exp %116 : vector<8x64xf32>
    %cst_31 = arith.constant 1.000000e+00 : f32
    %118 = vector.broadcast %cst_31 : f32 to vector<8x64xf32>
    %119 = arith.addf %118, %117 : vector<8x64xf32>
    %120 = arith.divf %118, %119 : vector<8x64xf32>
    %121 = vector.extract_strided_slice %111 {offsets = [0, 64], sizes = [8, 64], strides = [1, 1]} : vector<8x192xf32> to vector<8x64xf32>
    %122 = vector.extract_strided_slice %112 {offsets = [0, 64], sizes = [8, 64], strides = [1, 1]} : vector<8x192xf32> to vector<8x64xf32>
    %123 = arith.addf %121, %122 : vector<8x64xf32>
    %124 = arith.negf %123 : vector<8x64xf32>
    %125 = math.exp %124 : vector<8x64xf32>
    %cst_32 = arith.constant 1.000000e+00 : f32
    %126 = vector.broadcast %cst_32 : f32 to vector<8x64xf32>
    %127 = arith.addf %126, %125 : vector<8x64xf32>
    %128 = arith.divf %126, %127 : vector<8x64xf32>
    %129 = vector.extract_strided_slice %111 {offsets = [0, 128], sizes = [8, 64], strides = [1, 1]} : vector<8x192xf32> to vector<8x64xf32>
    %130 = vector.extract_strided_slice %112 {offsets = [0, 128], sizes = [8, 64], strides = [1, 1]} : vector<8x192xf32> to vector<8x64xf32>
    %131 = vector.broadcast %4 : vector<1x64xf32> to vector<8x64xf32>
    %132 = arith.addf %130, %131 : vector<8x64xf32>
    %133 = arith.mulf %120, %132 : vector<8x64xf32>
    %134 = arith.addf %129, %133 : vector<8x64xf32>
    %135 = math.tanh %134 : vector<8x64xf32>
    %cst_33 = arith.constant 1.000000e+00 : f32
    %136 = vector.broadcast %cst_33 : f32 to vector<8x64xf32>
    %137 = arith.subf %136, %128 : vector<8x64xf32>
    %138 = arith.mulf %137, %135 : vector<8x64xf32>
    %139 = arith.mulf %128, %107 : vector<8x64xf32>
    %140 = arith.addf %138, %139 : vector<8x64xf32>
    %141 = vector.shape_cast %140 : vector<8x64xf32> to vector<1x8x64xf32>
    %c3 = arith.constant 3 : index
    %c0_34 = arith.constant 0 : index
    %c0_35 = arith.constant 0 : index
    %142 = vector.load %arg9[%c3, %c0_34, %c0_35] : memref<8x8x64xf32, #tpu.memory_space<vmem>>, vector<1x8x64xf32>
    tpu.vector_store %arg9[%c3, %c0_34, %c0_35], %141 {strides = array<i32>} : memref<8x8x64xf32, #tpu.memory_space<vmem>>, vector<1x8x64xf32>,
    %143 = vector.extract_strided_slice %9 {offsets = [4, 0, 0], sizes = [1, 8, 192], strides = [1, 1, 1]} : vector<8x8x192xf32> to vector<1x8x192xf32>
    %144 = vector.shape_cast %143 : vector<1x8x192xf32> to vector<8x192xf32>
    %cst_36 = arith.constant dense<0.000000e+00> : vector<8x192xf32>
    %145 = tpu.matmul %140, %2, %cst_36 {dimension_numbers = #tpu.dot_dimension_numbers<[1], [0], [0], [1], [0, 0, 1, 1], [], []>} : vector<8x64xf32>, vector<64x192xf32>, vector<8x192xf32> -> vector<8x192xf32>
    %146 = vector.extract_strided_slice %144 {offsets = [0, 0], sizes = [8, 64], strides = [1, 1]} : vector<8x192xf32> to vector<8x64xf32>
    %147 = vector.extract_strided_slice %145 {offsets = [0, 0], sizes = [8, 64], strides = [1, 1]} : vector<8x192xf32> to vector<8x64xf32>
    %148 = arith.addf %146, %147 : vector<8x64xf32>
    %149 = arith.negf %148 : vector<8x64xf32>
    %150 = math.exp %149 : vector<8x64xf32>
    %cst_37 = arith.constant 1.000000e+00 : f32
    %151 = vector.broadcast %cst_37 : f32 to vector<8x64xf32>
    %152 = arith.addf %151, %150 : vector<8x64xf32>
    %153 = arith.divf %151, %152 : vector<8x64xf32>
    %154 = vector.extract_strided_slice %144 {offsets = [0, 64], sizes = [8, 64], strides = [1, 1]} : vector<8x192xf32> to vector<8x64xf32>
    %155 = vector.extract_strided_slice %145 {offsets = [0, 64], sizes = [8, 64], strides = [1, 1]} : vector<8x192xf32> to vector<8x64xf32>
    %156 = arith.addf %154, %155 : vector<8x64xf32>
    %157 = arith.negf %156 : vector<8x64xf32>
    %158 = math.exp %157 : vector<8x64xf32>
    %cst_38 = arith.constant 1.000000e+00 : f32
    %159 = vector.broadcast %cst_38 : f32 to vector<8x64xf32>
    %160 = arith.addf %159, %158 : vector<8x64xf32>
    %161 = arith.divf %159, %160 : vector<8x64xf32>
    %162 = vector.extract_strided_slice %144 {offsets = [0, 128], sizes = [8, 64], strides = [1, 1]} : vector<8x192xf32> to vector<8x64xf32>
    %163 = vector.extract_strided_slice %145 {offsets = [0, 128], sizes = [8, 64], strides = [1, 1]} : vector<8x192xf32> to vector<8x64xf32>
    %164 = vector.broadcast %4 : vector<1x64xf32> to vector<8x64xf32>
    %165 = arith.addf %163, %164 : vector<8x64xf32>
    %166 = arith.mulf %153, %165 : vector<8x64xf32>
    %167 = arith.addf %162, %166 : vector<8x64xf32>
    %168 = math.tanh %167 : vector<8x64xf32>
    %cst_39 = arith.constant 1.000000e+00 : f32
    %169 = vector.broadcast %cst_39 : f32 to vector<8x64xf32>
    %170 = arith.subf %169, %161 : vector<8x64xf32>
    %171 = arith.mulf %170, %168 : vector<8x64xf32>
    %172 = arith.mulf %161, %140 : vector<8x64xf32>
    %173 = arith.addf %171, %172 : vector<8x64xf32>
    %174 = vector.shape_cast %173 : vector<8x64xf32> to vector<1x8x64xf32>
    %c4 = arith.constant 4 : index
    %c0_40 = arith.constant 0 : index
    %c0_41 = arith.constant 0 : index
    %175 = vector.load %arg9[%c4, %c0_40, %c0_41] : memref<8x8x64xf32, #tpu.memory_space<vmem>>, vector<1x8x64xf32>
    tpu.vector_store %arg9[%c4, %c0_40, %c0_41], %174 {strides = array<i32>} : memref<8x8x64xf32, #tpu.memory_space<vmem>>, vector<1x8x64xf32>,
    %176 = vector.extract_strided_slice %9 {offsets = [5, 0, 0], sizes = [1, 8, 192], strides = [1, 1, 1]} : vector<8x8x192xf32> to vector<1x8x192xf32>
    %177 = vector.shape_cast %176 : vector<1x8x192xf32> to vector<8x192xf32>
    %cst_42 = arith.constant dense<0.000000e+00> : vector<8x192xf32>
    %178 = tpu.matmul %173, %2, %cst_42 {dimension_numbers = #tpu.dot_dimension_numbers<[1], [0], [0], [1], [0, 0, 1, 1], [], []>} : vector<8x64xf32>, vector<64x192xf32>, vector<8x192xf32> -> vector<8x192xf32>
    %179 = vector.extract_strided_slice %177 {offsets = [0, 0], sizes = [8, 64], strides = [1, 1]} : vector<8x192xf32> to vector<8x64xf32>
    %180 = vector.extract_strided_slice %178 {offsets = [0, 0], sizes = [8, 64], strides = [1, 1]} : vector<8x192xf32> to vector<8x64xf32>
    %181 = arith.addf %179, %180 : vector<8x64xf32>
    %182 = arith.negf %181 : vector<8x64xf32>
    %183 = math.exp %182 : vector<8x64xf32>
    %cst_43 = arith.constant 1.000000e+00 : f32
    %184 = vector.broadcast %cst_43 : f32 to vector<8x64xf32>
    %185 = arith.addf %184, %183 : vector<8x64xf32>
    %186 = arith.divf %184, %185 : vector<8x64xf32>
    %187 = vector.extract_strided_slice %177 {offsets = [0, 64], sizes = [8, 64], strides = [1, 1]} : vector<8x192xf32> to vector<8x64xf32>
    %188 = vector.extract_strided_slice %178 {offsets = [0, 64], sizes = [8, 64], strides = [1, 1]} : vector<8x192xf32> to vector<8x64xf32>
    %189 = arith.addf %187, %188 : vector<8x64xf32>
    %190 = arith.negf %189 : vector<8x64xf32>
    %191 = math.exp %190 : vector<8x64xf32>
    %cst_44 = arith.constant 1.000000e+00 : f32
    %192 = vector.broadcast %cst_44 : f32 to vector<8x64xf32>
    %193 = arith.addf %192, %191 : vector<8x64xf32>
    %194 = arith.divf %192, %193 : vector<8x64xf32>
    %195 = vector.extract_strided_slice %177 {offsets = [0, 128], sizes = [8, 64], strides = [1, 1]} : vector<8x192xf32> to vector<8x64xf32>
    %196 = vector.extract_strided_slice %178 {offsets = [0, 128], sizes = [8, 64], strides = [1, 1]} : vector<8x192xf32> to vector<8x64xf32>
    %197 = vector.broadcast %4 : vector<1x64xf32> to vector<8x64xf32>
    %198 = arith.addf %196, %197 : vector<8x64xf32>
    %199 = arith.mulf %186, %198 : vector<8x64xf32>
    %200 = arith.addf %195, %199 : vector<8x64xf32>
    %201 = math.tanh %200 : vector<8x64xf32>
    %cst_45 = arith.constant 1.000000e+00 : f32
    %202 = vector.broadcast %cst_45 : f32 to vector<8x64xf32>
    %203 = arith.subf %202, %194 : vector<8x64xf32>
    %204 = arith.mulf %203, %201 : vector<8x64xf32>
    %205 = arith.mulf %194, %173 : vector<8x64xf32>
    %206 = arith.addf %204, %205 : vector<8x64xf32>
    %207 = vector.shape_cast %206 : vector<8x64xf32> to vector<1x8x64xf32>
    %c5 = arith.constant 5 : index
    %c0_46 = arith.constant 0 : index
    %c0_47 = arith.constant 0 : index
    %208 = vector.load %arg9[%c5, %c0_46, %c0_47] : memref<8x8x64xf32, #tpu.memory_space<vmem>>, vector<1x8x64xf32>
    tpu.vector_store %arg9[%c5, %c0_46, %c0_47], %207 {strides = array<i32>} : memref<8x8x64xf32, #tpu.memory_space<vmem>>, vector<1x8x64xf32>,
    %209 = vector.extract_strided_slice %9 {offsets = [6, 0, 0], sizes = [1, 8, 192], strides = [1, 1, 1]} : vector<8x8x192xf32> to vector<1x8x192xf32>
    %210 = vector.shape_cast %209 : vector<1x8x192xf32> to vector<8x192xf32>
    %cst_48 = arith.constant dense<0.000000e+00> : vector<8x192xf32>
    %211 = tpu.matmul %206, %2, %cst_48 {dimension_numbers = #tpu.dot_dimension_numbers<[1], [0], [0], [1], [0, 0, 1, 1], [], []>} : vector<8x64xf32>, vector<64x192xf32>, vector<8x192xf32> -> vector<8x192xf32>
    %212 = vector.extract_strided_slice %210 {offsets = [0, 0], sizes = [8, 64], strides = [1, 1]} : vector<8x192xf32> to vector<8x64xf32>
    %213 = vector.extract_strided_slice %211 {offsets = [0, 0], sizes = [8, 64], strides = [1, 1]} : vector<8x192xf32> to vector<8x64xf32>
    %214 = arith.addf %212, %213 : vector<8x64xf32>
    %215 = arith.negf %214 : vector<8x64xf32>
    %216 = math.exp %215 : vector<8x64xf32>
    %cst_49 = arith.constant 1.000000e+00 : f32
    %217 = vector.broadcast %cst_49 : f32 to vector<8x64xf32>
    %218 = arith.addf %217, %216 : vector<8x64xf32>
    %219 = arith.divf %217, %218 : vector<8x64xf32>
    %220 = vector.extract_strided_slice %210 {offsets = [0, 64], sizes = [8, 64], strides = [1, 1]} : vector<8x192xf32> to vector<8x64xf32>
    %221 = vector.extract_strided_slice %211 {offsets = [0, 64], sizes = [8, 64], strides = [1, 1]} : vector<8x192xf32> to vector<8x64xf32>
    %222 = arith.addf %220, %221 : vector<8x64xf32>
    %223 = arith.negf %222 : vector<8x64xf32>
    %224 = math.exp %223 : vector<8x64xf32>
    %cst_50 = arith.constant 1.000000e+00 : f32
    %225 = vector.broadcast %cst_50 : f32 to vector<8x64xf32>
    %226 = arith.addf %225, %224 : vector<8x64xf32>
    %227 = arith.divf %225, %226 : vector<8x64xf32>
    %228 = vector.extract_strided_slice %210 {offsets = [0, 128], sizes = [8, 64], strides = [1, 1]} : vector<8x192xf32> to vector<8x64xf32>
    %229 = vector.extract_strided_slice %211 {offsets = [0, 128], sizes = [8, 64], strides = [1, 1]} : vector<8x192xf32> to vector<8x64xf32>
    %230 = vector.broadcast %4 : vector<1x64xf32> to vector<8x64xf32>
    %231 = arith.addf %229, %230 : vector<8x64xf32>
    %232 = arith.mulf %219, %231 : vector<8x64xf32>
    %233 = arith.addf %228, %232 : vector<8x64xf32>
    %234 = math.tanh %233 : vector<8x64xf32>
    %cst_51 = arith.constant 1.000000e+00 : f32
    %235 = vector.broadcast %cst_51 : f32 to vector<8x64xf32>
    %236 = arith.subf %235, %227 : vector<8x64xf32>
    %237 = arith.mulf %236, %234 : vector<8x64xf32>
    %238 = arith.mulf %227, %206 : vector<8x64xf32>
    %239 = arith.addf %237, %238 : vector<8x64xf32>
    %240 = vector.shape_cast %239 : vector<8x64xf32> to vector<1x8x64xf32>
    %c6 = arith.constant 6 : index
    %c0_52 = arith.constant 0 : index
    %c0_53 = arith.constant 0 : index
    %241 = vector.load %arg9[%c6, %c0_52, %c0_53] : memref<8x8x64xf32, #tpu.memory_space<vmem>>, vector<1x8x64xf32>
    tpu.vector_store %arg9[%c6, %c0_52, %c0_53], %240 {strides = array<i32>} : memref<8x8x64xf32, #tpu.memory_space<vmem>>, vector<1x8x64xf32>,
    %242 = vector.extract_strided_slice %9 {offsets = [7, 0, 0], sizes = [1, 8, 192], strides = [1, 1, 1]} : vector<8x8x192xf32> to vector<1x8x192xf32>
    %243 = vector.shape_cast %242 : vector<1x8x192xf32> to vector<8x192xf32>
    %cst_54 = arith.constant dense<0.000000e+00> : vector<8x192xf32>
    %244 = tpu.matmul %239, %2, %cst_54 {dimension_numbers = #tpu.dot_dimension_numbers<[1], [0], [0], [1], [0, 0, 1, 1], [], []>} : vector<8x64xf32>, vector<64x192xf32>, vector<8x192xf32> -> vector<8x192xf32>
    %245 = vector.extract_strided_slice %243 {offsets = [0, 0], sizes = [8, 64], strides = [1, 1]} : vector<8x192xf32> to vector<8x64xf32>
    %246 = vector.extract_strided_slice %244 {offsets = [0, 0], sizes = [8, 64], strides = [1, 1]} : vector<8x192xf32> to vector<8x64xf32>
    %247 = arith.addf %245, %246 : vector<8x64xf32>
    %248 = arith.negf %247 : vector<8x64xf32>
    %249 = math.exp %248 : vector<8x64xf32>
    %cst_55 = arith.constant 1.000000e+00 : f32
    %250 = vector.broadcast %cst_55 : f32 to vector<8x64xf32>
    %251 = arith.addf %250, %249 : vector<8x64xf32>
    %252 = arith.divf %250, %251 : vector<8x64xf32>
    %253 = vector.extract_strided_slice %243 {offsets = [0, 64], sizes = [8, 64], strides = [1, 1]} : vector<8x192xf32> to vector<8x64xf32>
    %254 = vector.extract_strided_slice %244 {offsets = [0, 64], sizes = [8, 64], strides = [1, 1]} : vector<8x192xf32> to vector<8x64xf32>
    %255 = arith.addf %253, %254 : vector<8x64xf32>
    %256 = arith.negf %255 : vector<8x64xf32>
    %257 = math.exp %256 : vector<8x64xf32>
    %cst_56 = arith.constant 1.000000e+00 : f32
    %258 = vector.broadcast %cst_56 : f32 to vector<8x64xf32>
    %259 = arith.addf %258, %257 : vector<8x64xf32>
    %260 = arith.divf %258, %259 : vector<8x64xf32>
    %261 = vector.extract_strided_slice %243 {offsets = [0, 128], sizes = [8, 64], strides = [1, 1]} : vector<8x192xf32> to vector<8x64xf32>
    %262 = vector.extract_strided_slice %244 {offsets = [0, 128], sizes = [8, 64], strides = [1, 1]} : vector<8x192xf32> to vector<8x64xf32>
    %263 = vector.broadcast %4 : vector<1x64xf32> to vector<8x64xf32>
    %264 = arith.addf %262, %263 : vector<8x64xf32>
    %265 = arith.mulf %252, %264 : vector<8x64xf32>
    %266 = arith.addf %261, %265 : vector<8x64xf32>
    %267 = math.tanh %266 : vector<8x64xf32>
    %cst_57 = arith.constant 1.000000e+00 : f32
    %268 = vector.broadcast %cst_57 : f32 to vector<8x64xf32>
    %269 = arith.subf %268, %260 : vector<8x64xf32>
    %270 = arith.mulf %269, %267 : vector<8x64xf32>
    %271 = arith.mulf %260, %239 : vector<8x64xf32>
    %272 = arith.addf %270, %271 : vector<8x64xf32>
    %273 = vector.shape_cast %272 : vector<8x64xf32> to vector<1x8x64xf32>
    %c7 = arith.constant 7 : index
    %c0_58 = arith.constant 0 : index
    %c0_59 = arith.constant 0 : index
    %274 = vector.load %arg9[%c7, %c0_58, %c0_59] : memref<8x8x64xf32, #tpu.memory_space<vmem>>, vector<1x8x64xf32>
    tpu.vector_store %arg9[%c7, %c0_58, %c0_59], %273 {strides = array<i32>} : memref<8x8x64xf32, #tpu.memory_space<vmem>>, vector<1x8x64xf32>,
    %c0_60 = arith.constant 0 : index
    %c0_61 = arith.constant 0 : index
    %275 = vector.load %arg11[%c0_60, %c0_61] : memref<8x64xf32, #tpu.memory_space<vmem>>, vector<8x64xf32>
    tpu.vector_store %arg11[%c0_60, %c0_61], %272 {strides = array<i32>} : memref<8x64xf32, #tpu.memory_space<vmem>>, vector<8x64xf32>,
    %c0_62 = arith.constant 0 : index
    %c0_63 = arith.constant 0 : index
    %c0_64 = arith.constant 0 : index
    %276 = vector.load %arg9[%c0_62, %c0_63, %c0_64] : memref<8x8x64xf32, #tpu.memory_space<vmem>>, vector<8x8x64xf32>
    %c0_65 = arith.constant 0 : index
    %c0_66 = arith.constant 0 : index
    %277 = vector.load %arg5[%c0_65, %c0_66] : memref<64x192xf32, #tpu.memory_space<vmem>>, vector<64x192xf32>
    %c0_67 = arith.constant 0 : index
    %c0_68 = arith.constant 0 : index
    %278 = vector.load %arg6[%c0_67, %c0_68] : memref<64x192xf32, #tpu.memory_space<vmem>>, vector<64x192xf32>
    %c0_69 = arith.constant 0 : index
    %c0_70 = arith.constant 0 : index
    %279 = vector.load %arg7[%c0_69, %c0_70] : memref<1x192xf32, #tpu.memory_space<vmem>>, vector<1x192xf32>
    %c0_71 = arith.constant 0 : index
    %c0_72 = arith.constant 0 : index
    %280 = vector.load %arg8[%c0_71, %c0_72] : memref<1x64xf32, #tpu.memory_space<vmem>>, vector<1x64xf32>
    %281 = vector.shape_cast %276 : vector<8x8x64xf32> to vector<64x64xf32>
    %cst_73 = arith.constant dense<0.000000e+00> : vector<64x192xf32>
    %282 = tpu.matmul %281, %277, %cst_73 {dimension_numbers = #tpu.dot_dimension_numbers<[1], [0], [0], [1], [0, 0, 1, 1], [], []>} : vector<64x64xf32>, vector<64x192xf32>, vector<64x192xf32> -> vector<64x192xf32>
    %283 = vector.broadcast %279 : vector<1x192xf32> to vector<64x192xf32>
    %284 = arith.addf %282, %283 : vector<64x192xf32>
    %285 = vector.shape_cast %284 : vector<64x192xf32> to vector<4x16x192xf32>
    %cst_74 = arith.constant 0.000000e+00 : f32
    %286 = vector.broadcast %cst_74 : f32 to vector<16x64xf32>
    %287 = vector.extract_strided_slice %285 {offsets = [0, 0, 0], sizes = [1, 16, 192], strides = [1, 1, 1]} : vector<4x16x192xf32> to vector<1x16x192xf32>
    %288 = vector.shape_cast %287 : vector<1x16x192xf32> to vector<16x192xf32>
    %cst_75 = arith.constant dense<0.000000e+00> : vector<16x192xf32>
    %289 = tpu.matmul %286, %278, %cst_75 {dimension_numbers = #tpu.dot_dimension_numbers<[1], [0], [0], [1], [0, 0, 1, 1], [], []>} : vector<16x64xf32>, vector<64x192xf32>, vector<16x192xf32> -> vector<16x192xf32>
    %290 = vector.extract_strided_slice %288 {offsets = [0, 0], sizes = [16, 64], strides = [1, 1]} : vector<16x192xf32> to vector<16x64xf32>
    %291 = vector.extract_strided_slice %289 {offsets = [0, 0], sizes = [16, 64], strides = [1, 1]} : vector<16x192xf32> to vector<16x64xf32>
    %292 = arith.addf %290, %291 : vector<16x64xf32>
    %293 = arith.negf %292 : vector<16x64xf32>
    %294 = math.exp %293 : vector<16x64xf32>
    %cst_76 = arith.constant 1.000000e+00 : f32
    %295 = vector.broadcast %cst_76 : f32 to vector<16x64xf32>
    %296 = arith.addf %295, %294 : vector<16x64xf32>
    %297 = arith.divf %295, %296 : vector<16x64xf32>
    %298 = vector.extract_strided_slice %288 {offsets = [0, 64], sizes = [16, 64], strides = [1, 1]} : vector<16x192xf32> to vector<16x64xf32>
    %299 = vector.extract_strided_slice %289 {offsets = [0, 64], sizes = [16, 64], strides = [1, 1]} : vector<16x192xf32> to vector<16x64xf32>
    %300 = arith.addf %298, %299 : vector<16x64xf32>
    %301 = arith.negf %300 : vector<16x64xf32>
    %302 = math.exp %301 : vector<16x64xf32>
    %cst_77 = arith.constant 1.000000e+00 : f32
    %303 = vector.broadcast %cst_77 : f32 to vector<16x64xf32>
    %304 = arith.addf %303, %302 : vector<16x64xf32>
    %305 = arith.divf %303, %304 : vector<16x64xf32>
    %306 = vector.extract_strided_slice %288 {offsets = [0, 128], sizes = [16, 64], strides = [1, 1]} : vector<16x192xf32> to vector<16x64xf32>
    %307 = vector.extract_strided_slice %289 {offsets = [0, 128], sizes = [16, 64], strides = [1, 1]} : vector<16x192xf32> to vector<16x64xf32>
    %308 = vector.broadcast %280 : vector<1x64xf32> to vector<16x64xf32>
    %309 = arith.addf %307, %308 : vector<16x64xf32>
    %310 = arith.mulf %297, %309 : vector<16x64xf32>
    %311 = arith.addf %306, %310 : vector<16x64xf32>
    %312 = math.tanh %311 : vector<16x64xf32>
    %cst_78 = arith.constant 1.000000e+00 : f32
    %313 = vector.broadcast %cst_78 : f32 to vector<16x64xf32>
    %314 = arith.subf %313, %305 : vector<16x64xf32>
    %315 = arith.mulf %314, %312 : vector<16x64xf32>
    %316 = arith.mulf %305, %286 : vector<16x64xf32>
    %317 = arith.addf %315, %316 : vector<16x64xf32>
    %318 = vector.shape_cast %317 : vector<16x64xf32> to vector<2x8x64xf32>
    %c0_79 = arith.constant 0 : index
    %c0_80 = arith.constant 0 : index
    %c0_81 = arith.constant 0 : index
    %319 = vector.load %arg10[%c0_79, %c0_80, %c0_81] : memref<8x8x64xf32, #tpu.memory_space<vmem>>, vector<2x8x64xf32>
    tpu.vector_store %arg10[%c0_79, %c0_80, %c0_81], %318 {strides = array<i32>} : memref<8x8x64xf32, #tpu.memory_space<vmem>>, vector<2x8x64xf32>,
    %320 = vector.extract_strided_slice %285 {offsets = [1, 0, 0], sizes = [1, 16, 192], strides = [1, 1, 1]} : vector<4x16x192xf32> to vector<1x16x192xf32>
    %321 = vector.shape_cast %320 : vector<1x16x192xf32> to vector<16x192xf32>
    %cst_82 = arith.constant dense<0.000000e+00> : vector<16x192xf32>
    %322 = tpu.matmul %317, %278, %cst_82 {dimension_numbers = #tpu.dot_dimension_numbers<[1], [0], [0], [1], [0, 0, 1, 1], [], []>} : vector<16x64xf32>, vector<64x192xf32>, vector<16x192xf32> -> vector<16x192xf32>
    %323 = vector.extract_strided_slice %321 {offsets = [0, 0], sizes = [16, 64], strides = [1, 1]} : vector<16x192xf32> to vector<16x64xf32>
    %324 = vector.extract_strided_slice %322 {offsets = [0, 0], sizes = [16, 64], strides = [1, 1]} : vector<16x192xf32> to vector<16x64xf32>
    %325 = arith.addf %323, %324 : vector<16x64xf32>
    %326 = arith.negf %325 : vector<16x64xf32>
    %327 = math.exp %326 : vector<16x64xf32>
    %cst_83 = arith.constant 1.000000e+00 : f32
    %328 = vector.broadcast %cst_83 : f32 to vector<16x64xf32>
    %329 = arith.addf %328, %327 : vector<16x64xf32>
    %330 = arith.divf %328, %329 : vector<16x64xf32>
    %331 = vector.extract_strided_slice %321 {offsets = [0, 64], sizes = [16, 64], strides = [1, 1]} : vector<16x192xf32> to vector<16x64xf32>
    %332 = vector.extract_strided_slice %322 {offsets = [0, 64], sizes = [16, 64], strides = [1, 1]} : vector<16x192xf32> to vector<16x64xf32>
    %333 = arith.addf %331, %332 : vector<16x64xf32>
    %334 = arith.negf %333 : vector<16x64xf32>
    %335 = math.exp %334 : vector<16x64xf32>
    %cst_84 = arith.constant 1.000000e+00 : f32
    %336 = vector.broadcast %cst_84 : f32 to vector<16x64xf32>
    %337 = arith.addf %336, %335 : vector<16x64xf32>
    %338 = arith.divf %336, %337 : vector<16x64xf32>
    %339 = vector.extract_strided_slice %321 {offsets = [0, 128], sizes = [16, 64], strides = [1, 1]} : vector<16x192xf32> to vector<16x64xf32>
    %340 = vector.extract_strided_slice %322 {offsets = [0, 128], sizes = [16, 64], strides = [1, 1]} : vector<16x192xf32> to vector<16x64xf32>
    %341 = vector.broadcast %280 : vector<1x64xf32> to vector<16x64xf32>
    %342 = arith.addf %340, %341 : vector<16x64xf32>
    %343 = arith.mulf %330, %342 : vector<16x64xf32>
    %344 = arith.addf %339, %343 : vector<16x64xf32>
    %345 = math.tanh %344 : vector<16x64xf32>
    %cst_85 = arith.constant 1.000000e+00 : f32
    %346 = vector.broadcast %cst_85 : f32 to vector<16x64xf32>
    %347 = arith.subf %346, %338 : vector<16x64xf32>
    %348 = arith.mulf %347, %345 : vector<16x64xf32>
    %349 = arith.mulf %338, %317 : vector<16x64xf32>
    %350 = arith.addf %348, %349 : vector<16x64xf32>
    %351 = vector.shape_cast %350 : vector<16x64xf32> to vector<2x8x64xf32>
    %c2_86 = arith.constant 2 : index
    %c0_87 = arith.constant 0 : index
    %c0_88 = arith.constant 0 : index
    %352 = vector.load %arg10[%c2_86, %c0_87, %c0_88] : memref<8x8x64xf32, #tpu.memory_space<vmem>>, vector<2x8x64xf32>
    tpu.vector_store %arg10[%c2_86, %c0_87, %c0_88], %351 {strides = array<i32>} : memref<8x8x64xf32, #tpu.memory_space<vmem>>, vector<2x8x64xf32>,
    %353 = vector.extract_strided_slice %285 {offsets = [2, 0, 0], sizes = [1, 16, 192], strides = [1, 1, 1]} : vector<4x16x192xf32> to vector<1x16x192xf32>
    %354 = vector.shape_cast %353 : vector<1x16x192xf32> to vector<16x192xf32>
    %cst_89 = arith.constant dense<0.000000e+00> : vector<16x192xf32>
    %355 = tpu.matmul %350, %278, %cst_89 {dimension_numbers = #tpu.dot_dimension_numbers<[1], [0], [0], [1], [0, 0, 1, 1], [], []>} : vector<16x64xf32>, vector<64x192xf32>, vector<16x192xf32> -> vector<16x192xf32>
    %356 = vector.extract_strided_slice %354 {offsets = [0, 0], sizes = [16, 64], strides = [1, 1]} : vector<16x192xf32> to vector<16x64xf32>
    %357 = vector.extract_strided_slice %355 {offsets = [0, 0], sizes = [16, 64], strides = [1, 1]} : vector<16x192xf32> to vector<16x64xf32>
    %358 = arith.addf %356, %357 : vector<16x64xf32>
    %359 = arith.negf %358 : vector<16x64xf32>
    %360 = math.exp %359 : vector<16x64xf32>
    %cst_90 = arith.constant 1.000000e+00 : f32
    %361 = vector.broadcast %cst_90 : f32 to vector<16x64xf32>
    %362 = arith.addf %361, %360 : vector<16x64xf32>
    %363 = arith.divf %361, %362 : vector<16x64xf32>
    %364 = vector.extract_strided_slice %354 {offsets = [0, 64], sizes = [16, 64], strides = [1, 1]} : vector<16x192xf32> to vector<16x64xf32>
    %365 = vector.extract_strided_slice %355 {offsets = [0, 64], sizes = [16, 64], strides = [1, 1]} : vector<16x192xf32> to vector<16x64xf32>
    %366 = arith.addf %364, %365 : vector<16x64xf32>
    %367 = arith.negf %366 : vector<16x64xf32>
    %368 = math.exp %367 : vector<16x64xf32>
    %cst_91 = arith.constant 1.000000e+00 : f32
    %369 = vector.broadcast %cst_91 : f32 to vector<16x64xf32>
    %370 = arith.addf %369, %368 : vector<16x64xf32>
    %371 = arith.divf %369, %370 : vector<16x64xf32>
    %372 = vector.extract_strided_slice %354 {offsets = [0, 128], sizes = [16, 64], strides = [1, 1]} : vector<16x192xf32> to vector<16x64xf32>
    %373 = vector.extract_strided_slice %355 {offsets = [0, 128], sizes = [16, 64], strides = [1, 1]} : vector<16x192xf32> to vector<16x64xf32>
    %374 = vector.broadcast %280 : vector<1x64xf32> to vector<16x64xf32>
    %375 = arith.addf %373, %374 : vector<16x64xf32>
    %376 = arith.mulf %363, %375 : vector<16x64xf32>
    %377 = arith.addf %372, %376 : vector<16x64xf32>
    %378 = math.tanh %377 : vector<16x64xf32>
    %cst_92 = arith.constant 1.000000e+00 : f32
    %379 = vector.broadcast %cst_92 : f32 to vector<16x64xf32>
    %380 = arith.subf %379, %371 : vector<16x64xf32>
    %381 = arith.mulf %380, %378 : vector<16x64xf32>
    %382 = arith.mulf %371, %350 : vector<16x64xf32>
    %383 = arith.addf %381, %382 : vector<16x64xf32>
    %384 = vector.shape_cast %383 : vector<16x64xf32> to vector<2x8x64xf32>
    %c4_93 = arith.constant 4 : index
    %c0_94 = arith.constant 0 : index
    %c0_95 = arith.constant 0 : index
    %385 = vector.load %arg10[%c4_93, %c0_94, %c0_95] : memref<8x8x64xf32, #tpu.memory_space<vmem>>, vector<2x8x64xf32>
    tpu.vector_store %arg10[%c4_93, %c0_94, %c0_95], %384 {strides = array<i32>} : memref<8x8x64xf32, #tpu.memory_space<vmem>>, vector<2x8x64xf32>,
    %386 = vector.extract_strided_slice %285 {offsets = [3, 0, 0], sizes = [1, 16, 192], strides = [1, 1, 1]} : vector<4x16x192xf32> to vector<1x16x192xf32>
    %387 = vector.shape_cast %386 : vector<1x16x192xf32> to vector<16x192xf32>
    %cst_96 = arith.constant dense<0.000000e+00> : vector<16x192xf32>
    %388 = tpu.matmul %383, %278, %cst_96 {dimension_numbers = #tpu.dot_dimension_numbers<[1], [0], [0], [1], [0, 0, 1, 1], [], []>} : vector<16x64xf32>, vector<64x192xf32>, vector<16x192xf32> -> vector<16x192xf32>
    %389 = vector.extract_strided_slice %387 {offsets = [0, 0], sizes = [16, 64], strides = [1, 1]} : vector<16x192xf32> to vector<16x64xf32>
    %390 = vector.extract_strided_slice %388 {offsets = [0, 0], sizes = [16, 64], strides = [1, 1]} : vector<16x192xf32> to vector<16x64xf32>
    %391 = arith.addf %389, %390 : vector<16x64xf32>
    %392 = arith.negf %391 : vector<16x64xf32>
    %393 = math.exp %392 : vector<16x64xf32>
    %cst_97 = arith.constant 1.000000e+00 : f32
    %394 = vector.broadcast %cst_97 : f32 to vector<16x64xf32>
    %395 = arith.addf %394, %393 : vector<16x64xf32>
    %396 = arith.divf %394, %395 : vector<16x64xf32>
    %397 = vector.extract_strided_slice %387 {offsets = [0, 64], sizes = [16, 64], strides = [1, 1]} : vector<16x192xf32> to vector<16x64xf32>
    %398 = vector.extract_strided_slice %388 {offsets = [0, 64], sizes = [16, 64], strides = [1, 1]} : vector<16x192xf32> to vector<16x64xf32>
    %399 = arith.addf %397, %398 : vector<16x64xf32>
    %400 = arith.negf %399 : vector<16x64xf32>
    %401 = math.exp %400 : vector<16x64xf32>
    %cst_98 = arith.constant 1.000000e+00 : f32
    %402 = vector.broadcast %cst_98 : f32 to vector<16x64xf32>
    %403 = arith.addf %402, %401 : vector<16x64xf32>
    %404 = arith.divf %402, %403 : vector<16x64xf32>
    %405 = vector.extract_strided_slice %387 {offsets = [0, 128], sizes = [16, 64], strides = [1, 1]} : vector<16x192xf32> to vector<16x64xf32>
    %406 = vector.extract_strided_slice %388 {offsets = [0, 128], sizes = [16, 64], strides = [1, 1]} : vector<16x192xf32> to vector<16x64xf32>
    %407 = vector.broadcast %280 : vector<1x64xf32> to vector<16x64xf32>
    %408 = arith.addf %406, %407 : vector<16x64xf32>
    %409 = arith.mulf %396, %408 : vector<16x64xf32>
    %410 = arith.addf %405, %409 : vector<16x64xf32>
    %411 = math.tanh %410 : vector<16x64xf32>
    %cst_99 = arith.constant 1.000000e+00 : f32
    %412 = vector.broadcast %cst_99 : f32 to vector<16x64xf32>
    %413 = arith.subf %412, %404 : vector<16x64xf32>
    %414 = arith.mulf %413, %411 : vector<16x64xf32>
    %415 = arith.mulf %404, %383 : vector<16x64xf32>
    %416 = arith.addf %414, %415 : vector<16x64xf32>
    %417 = vector.shape_cast %416 : vector<16x64xf32> to vector<2x8x64xf32>
    %c6_100 = arith.constant 6 : index
    %c0_101 = arith.constant 0 : index
    %c0_102 = arith.constant 0 : index
    %418 = vector.load %arg10[%c6_100, %c0_101, %c0_102] : memref<8x8x64xf32, #tpu.memory_space<vmem>>, vector<2x8x64xf32>
    tpu.vector_store %arg10[%c6_100, %c0_101, %c0_102], %417 {strides = array<i32>} : memref<8x8x64xf32, #tpu.memory_space<vmem>>, vector<2x8x64xf32>,
    %c0_103 = arith.constant 0 : index
    %c0_104 = arith.constant 0 : index
    %419 = vector.load %arg12[%c0_103, %c0_104] : memref<16x64xf32, #tpu.memory_space<vmem>>, vector<16x64xf32>
    tpu.vector_store %arg12[%c0_103, %c0_104], %416 {strides = array<i32>} : memref<16x64xf32, #tpu.memory_space<vmem>>, vector<16x64xf32>,
    return
  }
}

</mosaic_0001>

<llo_original>
// kernel: _lambda_.1
$region0: #{_lambda_.1}
  #allocation0 [shape = 'u32[]', space=smem, size = 0x4, offset = 0x4, fixed_abs, tag = 'smem constant byte address 0x4 - core index']
  #allocation1 [shape = 'u32[72,128]{1,0:T(1,128)}', space=vmem, size = 0x9000, scoped, tag = 'internal scratch']
  %s0 = inlined_call_operand.vmem [shape: f32[8,8,16], index: 0, kind: input, shape index: {}]
  %s1 = inlined_call_operand.vmem [shape: f32[16,192], index: 1, kind: input, shape index: {}]
  %s2 = inlined_call_operand.vmem [shape: f32[64,192], index: 2, kind: input, shape index: {}]
  %s3 = inlined_call_operand.vmem [shape: f32[1,192], index: 3, kind: input, shape index: {}]
  %s4 = inlined_call_operand.vmem [shape: f32[1,64], index: 4, kind: input, shape index: {}]
  %s5 = inlined_call_operand.vmem [shape: f32[64,192], index: 5, kind: input, shape index: {}]
  %s6 = inlined_call_operand.vmem [shape: f32[64,192], index: 6, kind: input, shape index: {}]
  %s7 = inlined_call_operand.vmem [shape: f32[1,192], index: 7, kind: input, shape index: {}]
  %s8 = inlined_call_operand.vmem [shape: f32[1,64], index: 8, kind: input, shape index: {}]
  %s9 = inlined_call_operand.vmem [shape: f32[8,8,64], index: 9, kind: output, shape index: {0}]
  %s10 = inlined_call_operand.vmem [shape: f32[8,8,64], index: 10, kind: output, shape index: {1}]
  %s11 = inlined_call_operand.vmem [shape: f32[8,64], index: 11, kind: output, shape index: {2}]
  %s12 = inlined_call_operand.vmem [shape: f32[16,64], index: 12, kind: output, shape index: {3}]
  %13 = xla_tuple %s9, %s10, %s11, %s12
  %s14 = sld [smem:[#allocation0]]
  $region70: #{_lambda_.1} parent=0
    _
  %s16 = ssub.s32 1, %s14
  %s17 = scalar_select 0, %s16, %s14
  // Predicated region
  $region2: #{_lambda_.1} parent=0 // pred_check
    _
  $region3: #{_lambda_.1} parent=0 // pred_check_branch
    %19 = sbr.rel (0) target = $region5
  $region4: #{_lambda_.1} parent=0 // pred_region
    _
  $region5: #{_lambda_.1} parent=0 // pred_fallthru
    _
  // Predicated region
  $region6: #{_lambda_.1} parent=0 // pred_check
    _
  $region7: #{_lambda_.1} parent=0 // pred_check_branch
    %21 = sbr.rel (0) target = $region9
  $region8: #{_lambda_.1} parent=0 // pred_region
    _
  $region9: #{_lambda_.1} parent=0 // pred_fallthru
    _
  // Predicated region
  $region10: #{_lambda_.1} parent=0 // pred_check
    _
  $region11: #{_lambda_.1} parent=0 // pred_check_branch
    %23 = sbr.rel (0) target = $region13
  $region12: #{_lambda_.1} parent=0 // pred_region
    _
  $region13: #{_lambda_.1} parent=0 // pred_fallthru
    _
  // Predicated region
  $region14: #{_lambda_.1} parent=0 // pred_check
    _
  $region15: #{_lambda_.1} parent=0 // pred_check_branch
    %25 = sbr.rel (0) target = $region17
  $region16: #{_lambda_.1} parent=0 // pred_region
    _
  $region17: #{_lambda_.1} parent=0 // pred_fallthru
    _
  // Predicated region
  $region18: #{_lambda_.1} parent=0 // pred_check
    _
  $region19: #{_lambda_.1} parent=0 // pred_check_branch
    %27 = sbr.rel (0) target = $region21
  $region20: #{_lambda_.1} parent=0 // pred_region
    _
  $region21: #{_lambda_.1} parent=0 // pred_fallthru
    _
  // Predicated region
  $region22: #{_lambda_.1} parent=0 // pred_check
    _
  $region23: #{_lambda_.1} parent=0 // pred_check_branch
    %29 = sbr.rel (0) target = $region25
  $region24: #{_lambda_.1} parent=0 // pred_region
    _
  $region25: #{_lambda_.1} parent=0 // pred_fallthru
    _
  // Predicated region
  $region26: #{_lambda_.1} parent=0 // pred_check
    _
  $region27: #{_lambda_.1} parent=0 // pred_check_branch
    %31 = sbr.rel (0) target = $region29
  $region28: #{_lambda_.1} parent=0 // pred_region
    _
  $region29: #{_lambda_.1} parent=0 // pred_fallthru
    _
  // Predicated region
  $region30: #{_lambda_.1} parent=0 // pred_check
    _
  $region31: #{_lambda_.1} parent=0 // pred_check_branch
    %33 = sbr.rel (0) target = $region33
  $region32: #{_lambda_.1} parent=0 // pred_region
    _
  $region33: #{_lambda_.1} parent=0 // pred_fallthru
    _
  // Predicated region
  $region34: #{_lambda_.1} parent=0 // pred_check
    _
  $region35: #{_lambda_.1} parent=0 // pred_check_branch
    %35 = sbr.rel (0) target = $region37
  $region36: #{_lambda_.1} parent=0 // pred_region
    _
  $region37: #{_lambda_.1} parent=0 // pred_fallthru
    _
  %v36 = vld [vmem:[%s0] sm:$0xff]
  %v37 = vld [vmem:[%s0 + $0x8] sm:$0xff]
  %v38 = vld [vmem:[%s0 + $0x10] sm:$0xff]
  %v39 = vld [vmem:[%s0 + $0x18] sm:$0xff]
  %v40 = vld [vmem:[%s0 + $0x20] sm:$0xff]
  %v41 = vld [vmem:[%s0 + $0x28] sm:$0xff]
  %v42 = vld [vmem:[%s0 + $0x30] sm:$0xff]
  %v43 = vld [vmem:[%s0 + $0x38] sm:$0xff]
  %v44 = vld [vmem:[%s1] sm:$0xff]
  %v45 = vld [vmem:[%s1 + $0x8] sm:$0xff]
  %v46 = vld [vmem:[%s1 + $0x10] sm:$0xff]
  %v47 = vld [vmem:[%s1 + $0x18] sm:$0xff]
  %v48 = vld [vmem:[%s2] sm:$0xff]
  %v49 = vld [vmem:[%s2 + $0x8] sm:$0xff]
  %v50 = vld [vmem:[%s2 + $0x10] sm:$0xff]
  %v51 = vld [vmem:[%s2 + $0x18] sm:$0xff]
  %v52 = vld [vmem:[%s2 + $0x20] sm:$0xff]
  %v53 = vld [vmem:[%s2 + $0x28] sm:$0xff]
  %v54 = vld [vmem:[%s2 + $0x30] sm:$0xff]
  %v55 = vld [vmem:[%s2 + $0x38] sm:$0xff]
  %v56 = vld [vmem:[%s2 + $0x40] sm:$0xff]
  %v57 = vld [vmem:[%s2 + $0x48] sm:$0xff]
  %v58 = vld [vmem:[%s2 + $0x50] sm:$0xff]
  %v59 = vld [vmem:[%s2 + $0x58] sm:$0xff]
  %v60 = vld [vmem:[%s2 + $0x60] sm:$0xff]
  %v61 = vld [vmem:[%s2 + $0x68] sm:$0xff]
  %v62 = vld [vmem:[%s2 + $0x70] sm:$0xff]
  %v63 = vld [vmem:[%s2 + $0x78] sm:$0xff]
  %v64 = vld [vmem:[%s3] sm:$0x3]
  %v65 = vld [vmem:[%s4] sm:$0x1]
  %v67 = vperm.slane %v64, 0
  %v68 = vperm.slane %v64, 1
  %vm71 = vcmask 130048
  %v73 = vsel %vm71, %v36, 0
  %v76 = vsel %vm71, %v37, 0
  %v79 = vsel %vm71, %v38, 0
  %v82 = vsel %vm71, %v39, 0
  %v85 = vsel %vm71, %v40, 0
  %v88 = vsel %vm71, %v41, 0
  %v91 = vsel %vm71, %v42, 0
  %v94 = vsel %vm71, %v43, 0
  %96 = vmatpush.msra.mxu0 0.0
  %97 = vmatpush.msra.mxu0 0.0
  %98 = vmatpush.msra.mxu0 0.0
  %99 = vmatpush.msra.mxu0 0.0
  %100 = vmatpush.msra.mxu0 0.0
  %101 = vmatpush.msra.mxu0 0.0
  %102 = vmatpush.msra.mxu0 0.0
  %103 = vmatpush.msra.mxu0 0.0
  %104 = vmatpush.msra.mxu0 0.0
  %105 = vmatpush.msra.mxu0 0.0
  %106 = vmatpush.msra.mxu0 0.0
  %107 = vmatpush.msra.mxu0 0.0
  %108 = vmatpush.msra.mxu0 0.0
  %109 = vmatpush.msra.mxu0 0.0
  %110 = vmatpush.msra.mxu0 %v46
  %111 = vmatpush.msra.mxu0 %v44
  %112 = vmatmul.f32.gmra.mxu0 %v73
  %v113 = vpop.f32.mrf.mxu0
  %v114 = vadd.f32 %v67, %v113
  %115 = vmatmul.f32.gmra.mxu0 %v76
  %v116 = vpop.f32.mrf.mxu0
  %v117 = vadd.f32 %v67, %v116
  %118 = vmatmul.f32.gmra.mxu0 %v79
  %v119 = vpop.f32.mrf.mxu0
  %v120 = vadd.f32 %v67, %v119
  %121 = vmatmul.f32.gmra.mxu0 %v82
  %v122 = vpop.f32.mrf.mxu0
  %v123 = vadd.f32 %v67, %v122
  %124 = vmatmul.f32.gmra.mxu0 %v85
  %v125 = vpop.f32.mrf.mxu0
  %v126 = vadd.f32 %v67, %v125
  %127 = vmatmul.f32.gmra.mxu0 %v88
  %v128 = vpop.f32.mrf.mxu0
  %v129 = vadd.f32 %v67, %v128
  %130 = vmatmul.f32.gmra.mxu0 %v91
  %v131 = vpop.f32.mrf.mxu0
  %v132 = vadd.f32 %v67, %v131
  %133 = vmatmul.f32.gmra.mxu0 %v94
  %v134 = vpop.f32.mrf.mxu0
  %v135 = vadd.f32 %v67, %v134
  %136 = vdwg.mxu0
  %137 = vmatpush.msra.mxu0 0.0
  %138 = vmatpush.msra.mxu0 0.0
  %139 = vmatpush.msra.mxu0 0.0
  %140 = vmatpush.msra.mxu0 0.0
  %141 = vmatpush.msra.mxu0 0.0
  %142 = vmatpush.msra.mxu0 0.0
  %143 = vmatpush.msra.mxu0 0.0
  %144 = vmatpush.msra.mxu0 0.0
  %145 = vmatpush.msra.mxu0 0.0
  %146 = vmatpush.msra.mxu0 0.0
  %147 = vmatpush.msra.mxu0 0.0
  %148 = vmatpush.msra.mxu0 0.0
  %149 = vmatpush.msra.mxu0 0.0
  %150 = vmatpush.msra.mxu0 0.0
  %151 = vmatpush.msra.mxu0 %v47
  %152 = vmatpush.msra.mxu0 %v45
  %153 = vmatmul.f32.gmra.mxu0 %v73
  %v154 = vpop.f32.mrf.mxu0
  %v155 = vadd.f32 %v68, %v154
  %156 = vmatmul.f32.gmra.mxu0 %v76
  %v157 = vpop.f32.mrf.mxu0
  %v158 = vadd.f32 %v68, %v157
  %159 = vmatmul.f32.gmra.mxu0 %v79
  %v160 = vpop.f32.mrf.mxu0
  %v161 = vadd.f32 %v68, %v160
  %162 = vmatmul.f32.gmra.mxu0 %v82
  %v163 = vpop.f32.mrf.mxu0
  %v164 = vadd.f32 %v68, %v163
  %165 = vmatmul.f32.gmra.mxu0 %v85
  %v166 = vpop.f32.mrf.mxu0
  %v167 = vadd.f32 %v68, %v166
  %168 = vmatmul.f32.gmra.mxu0 %v88
  %v169 = vpop.f32.mrf.mxu0
  %v170 = vadd.f32 %v68, %v169
  %171 = vmatmul.f32.gmra.mxu0 %v91
  %v172 = vpop.f32.mrf.mxu0
  %v173 = vadd.f32 %v68, %v172
  %174 = vmatmul.f32.gmra.mxu0 %v94
  %v175 = vpop.f32.mrf.mxu0
  %v176 = vadd.f32 %v68, %v175
  %177 = vdwg.mxu0
  %vm178 = vcmask 523264
  %v180 = vsel %vm178, 0.0, 0
  %182 = vmatpush.msra.mxu0 0.0
  %183 = vmatpush.msra.mxu0 0.0
  %184 = vmatpush.msra.mxu0 0.0
  %185 = vmatpush.msra.mxu0 0.0
  %186 = vmatpush.msra.mxu0 0.0
  %187 = vmatpush.msra.mxu0 0.0
  %188 = vmatpush.msra.mxu0 0.0
  %189 = vmatpush.msra.mxu0 0.0
  %190 = vmatpush.msra.mxu0 %v62
  %191 = vmatpush.msra.mxu0 %v60
  %192 = vmatpush.msra.mxu0 %v58
  %193 = vmatpush.msra.mxu0 %v56
  %194 = vmatpush.msra.mxu0 %v54
  %195 = vmatpush.msra.mxu0 %v52
  %196 = vmatpush.msra.mxu0 %v50
  %197 = vmatpush.msra.mxu0 %v48
  %198 = vmatmul.f32.gmra.mxu0 %v180
  %v199 = vpop.f32.mrf.mxu0
  %v200 = vadd.f32 0.0, %v199
  %201 = vdwg.mxu0
  %202 = vmatpush.msra.mxu0 0.0
  %203 = vmatpush.msra.mxu0 0.0
  %204 = vmatpush.msra.mxu0 0.0
  %205 = vmatpush.msra.mxu0 0.0
  %206 = vmatpush.msra.mxu0 0.0
  %207 = vmatpush.msra.mxu0 0.0
  %208 = vmatpush.msra.mxu0 0.0
  %209 = vmatpush.msra.mxu0 0.0
  %210 = vmatpush.msra.mxu0 %v63
  %211 = vmatpush.msra.mxu0 %v61
  %212 = vmatpush.msra.mxu0 %v59
  %213 = vmatpush.msra.mxu0 %v57
  %214 = vmatpush.msra.mxu0 %v55
  %215 = vmatpush.msra.mxu0 %v53
  %216 = vmatpush.msra.mxu0 %v51
  %217 = vmatpush.msra.mxu0 %v49
  %218 = vmatmul.f32.gmra.mxu0 %v180
  %v219 = vpop.f32.mrf.mxu0
  %v220 = vadd.f32 0.0, %v219
  %221 = vdwg.mxu0
  %v222 = vadd.f32 %v114, %v200
  %v223 = vxor.u32 %v222, 2147483648
  %v224 = vmul.f32 %v223, 1.442695
  %v225 = vpow.pop %v224
  %v226 = vadd.f32 %v225, 1.0
  %v227 = vrcp.pop %v226
  %v228 = vmul.f32 %v226, %v227
  %v229 = vsub.f32 1.0, %v228
  %v230 = vmul.f32 %v227, %v229
  %v231 = vadd.f32 %v227, %v230
  %vm232 = vweird.f32 %v226
  %vm233 = vweird.f32 %v227
  %vm234 = vmor %vm232, %vm233
  %v235 = vsel %vm234, %v227, %v231
  %v236 = vand.u32 2147483647, %v226
  %vm237 = vcmp.eq.f32.partialorder %v236, 8.507059e+37
  %v238 = vand.u32 %v226, 2147483648
  %v239 = vor.u32 1.1754944e-38, %v238
  %v240 = vsel %vm237, %v239, %v235
  %v241 = vmul.f32 1.0, %v240
  %v243 = vperm.slane %v65, 0
  %v245 = vadd.f32 %v220, %v243
  %v246 = vmul.f32 %v241, %v245
  %v247 = vadd.f32 %v155, %v246
  %v248 = vtanh.pop %v247
  %v249 = vsub.f32 1.0, %v241
  %251 = vrot.lane.b32.xlu0 %v248, 64
  %v252 = vpop.permute.xlu0 %251
  %v254 = vmul.f32 %v249, %v252
  %v255 = vmul.f32 %v241, 0.0
  %v256 = vadd.f32 %v254, %v255
  %258 = vrot.lane.b32.xlu0 %v256, 64
  %v259 = vpop.permute.xlu0 %258
  %261 = vst.msk [vmem:[%s9] sm:$0xff] %vm178, %v259
  %v262 = vsel %vm178, %v259, 0
  %264 = vmatpush.msra.mxu0 0.0
  %265 = vmatpush.msra.mxu0 0.0
  %266 = vmatpush.msra.mxu0 0.0
  %267 = vmatpush.msra.mxu0 0.0
  %268 = vmatpush.msra.mxu0 0.0
  %269 = vmatpush.msra.mxu0 0.0
  %270 = vmatpush.msra.mxu0 0.0
  %271 = vmatpush.msra.mxu0 0.0
  %272 = vmatpush.msra.mxu0 %v62
  %273 = vmatpush.msra.mxu0 %v60
  %274 = vmatpush.msra.mxu0 %v58
  %275 = vmatpush.msra.mxu0 %v56
  %276 = vmatpush.msra.mxu0 %v54
  %277 = vmatpush.msra.mxu0 %v52
  %278 = vmatpush.msra.mxu0 %v50
  %279 = vmatpush.msra.mxu0 %v48
  %280 = vmatmul.f32.gmra.mxu0 %v262
  %v281 = vpop.f32.mrf.mxu0
  %v282 = vadd.f32 0.0, %v281
  %283 = vdwg.mxu0
  %284 = vmatpush.msra.mxu0 0.0
  %285 = vmatpush.msra.mxu0 0.0
  %286 = vmatpush.msra.mxu0 0.0
  %287 = vmatpush.msra.mxu0 0.0
  %288 = vmatpush.msra.mxu0 0.0
  %289 = vmatpush.msra.mxu0 0.0
  %290 = vmatpush.msra.mxu0 0.0
  %291 = vmatpush.msra.mxu0 0.0
  %292 = vmatpush.msra.mxu0 %v63
  %293 = vmatpush.msra.mxu0 %v61
  %294 = vmatpush.msra.mxu0 %v59
  %295 = vmatpush.msra.mxu0 %v57
  %296 = vmatpush.msra.mxu0 %v55
  %297 = vmatpush.msra.mxu0 %v53
  %298 = vmatpush.msra.mxu0 %v51
  %299 = vmatpush.msra.mxu0 %v49
  %300 = vmatmul.f32.gmra.mxu0 %v262
  %v301 = vpop.f32.mrf.mxu0
  %v302 = vadd.f32 0.0, %v301
  %303 = vdwg.mxu0
  %v304 = vadd.f32 %v117, %v282
  %v305 = vxor.u32 %v304, 2147483648
  %v306 = vmul.f32 %v305, 1.442695
  %v307 = vpow.pop %v306
  %v308 = vadd.f32 %v307, 1.0
  %v309 = vrcp.pop %v308
  %v310 = vmul.f32 %v308, %v309
  %v311 = vsub.f32 1.0, %v310
  %v312 = vmul.f32 %v309, %v311
  %v313 = vadd.f32 %v309, %v312
  %vm314 = vweird.f32 %v308
  %vm315 = vweird.f32 %v309
  %vm316 = vmor %vm314, %vm315
  %v317 = vsel %vm316, %v309, %v313
  %v318 = vand.u32 2147483647, %v308
  %vm319 = vcmp.eq.f32.partialorder %v318, 8.507059e+37
  %v320 = vand.u32 %v308, 2147483648
  %v321 = vor.u32 1.1754944e-38, %v320
  %v322 = vsel %vm319, %v321, %v317
  %v323 = vmul.f32 1.0, %v322
  %v324 = vadd.f32 %v302, %v243
  %v325 = vmul.f32 %v323, %v324
  %v326 = vadd.f32 %v158, %v325
  %v327 = vtanh.pop %v326
  %v328 = vsub.f32 1.0, %v323
  %330 = vrot.lane.b32.xlu0 %v327, 64
  %v331 = vpop.permute.xlu0 %330
  %v333 = vmul.f32 %v328, %v331
  %v334 = vmul.f32 %v323, %v256
  %v335 = vadd.f32 %v333, %v334
  %337 = vrot.lane.b32.xlu0 %v335, 64
  %v338 = vpop.permute.xlu0 %337
  %s340 = scalar_lea.vmem %s9, 8
  %341 = vst.msk [vmem:[%s340] sm:$0xff] %vm178, %v338
  %v342 = vsel %vm178, %v338, 0
  %344 = vmatpush.msra.mxu0 0.0
  %345 = vmatpush.msra.mxu0 0.0
  %346 = vmatpush.msra.mxu0 0.0
  %347 = vmatpush.msra.mxu0 0.0
  %348 = vmatpush.msra.mxu0 0.0
  %349 = vmatpush.msra.mxu0 0.0
  %350 = vmatpush.msra.mxu0 0.0
  %351 = vmatpush.msra.mxu0 0.0
  %352 = vmatpush.msra.mxu0 %v62
  %353 = vmatpush.msra.mxu0 %v60
  %354 = vmatpush.msra.mxu0 %v58
  %355 = vmatpush.msra.mxu0 %v56
  %356 = vmatpush.msra.mxu0 %v54
  %357 = vmatpush.msra.mxu0 %v52
  %358 = vmatpush.msra.mxu0 %v50
  %359 = vmatpush.msra.mxu0 %v48
  %360 = vmatmul.f32.gmra.mxu0 %v342
  %v361 = vpop.f32.mrf.mxu0
  %v362 = vadd.f32 0.0, %v361
  %363 = vdwg.mxu0
  %364 = vmatpush.msra.mxu0 0.0
  %365 = vmatpush.msra.mxu0 0.0
  %366 = vmatpush.msra.mxu0 0.0
  %367 = vmatpush.msra.mxu0 0.0
  %368 = vmatpush.msra.mxu0 0.0
  %369 = vmatpush.msra.mxu0 0.0
  %370 = vmatpush.msra.mxu0 0.0
  %371 = vmatpush.msra.mxu0 0.0
  %372 = vmatpush.msra.mxu0 %v63
  %373 = vmatpush.msra.mxu0 %v61
  %374 = vmatpush.msra.mxu0 %v59
  %375 = vmatpush.msra.mxu0 %v57
  %376 = vmatpush.msra.mxu0 %v55
  %377 = vmatpush.msra.mxu0 %v53
  %378 = vmatpush.msra.mxu0 %v51
  %379 = vmatpush.msra.mxu0 %v49
  %380 = vmatmul.f32.gmra.mxu0 %v342
  %v381 = vpop.f32.mrf.mxu0
  %v382 = vadd.f32 0.0, %v381
  %383 = vdwg.mxu0
  %v384 = vadd.f32 %v120, %v362
  %v385 = vxor.u32 %v384, 2147483648
  %v386 = vmul.f32 %v385, 1.442695
  %v387 = vpow.pop %v386
  %v388 = vadd.f32 %v387, 1.0
  %v389 = vrcp.pop %v388
  %v390 = vmul.f32 %v388, %v389
  %v391 = vsub.f32 1.0, %v390
  %v392 = vmul.f32 %v389, %v391
  %v393 = vadd.f32 %v389, %v392
  %vm394 = vweird.f32 %v388
  %vm395 = vweird.f32 %v389
  %vm396 = vmor %vm394, %vm395
  %v397 = vsel %vm396, %v389, %v393
  %v398 = vand.u32 2147483647, %v388
  %vm399 = vcmp.eq.f32.partialorder %v398, 8.507059e+37
  %v400 = vand.u32 %v388, 2147483648
  %v401 = vor.u32 1.1754944e-38, %v400
  %v402 = vsel %vm399, %v401, %v397
  %v403 = vmul.f32 1.0, %v402
  %v404 = vadd.f32 %v382, %v243
  %v405 = vmul.f32 %v403, %v404
  %v406 = vadd.f32 %v161, %v405
  %v407 = vtanh.pop %v406
  %v408 = vsub.f32 1.0, %v403
  %410 = vrot.lane.b32.xlu0 %v407, 64
  %v411 = vpop.permute.xlu0 %410
  %v413 = vmul.f32 %v408, %v411
  %v414 = vmul.f32 %v403, %v335
  %v415 = vadd.f32 %v413, %v414
  %417 = vrot.lane.b32.xlu0 %v415, 64
  %v418 = vpop.permute.xlu0 %417
  %s420 = scalar_lea.vmem %s9, 16
  %421 = vst.msk [vmem:[%s420] sm:$0xff] %vm178, %v418
  %v422 = vsel %vm178, %v418, 0
  %424 = vmatpush.msra.mxu0 0.0
  %425 = vmatpush.msra.mxu0 0.0
  %426 = vmatpush.msra.mxu0 0.0
  %427 = vmatpush.msra.mxu0 0.0
  %428 = vmatpush.msra.mxu0 0.0
  %429 = vmatpush.msra.mxu0 0.0
  %430 = vmatpush.msra.mxu0 0.0
  %431 = vmatpush.msra.mxu0 0.0
  %432 = vmatpush.msra.mxu0 %v62
  %433 = vmatpush.msra.mxu0 %v60
  %434 = vmatpush.msra.mxu0 %v58
  %435 = vmatpush.msra.mxu0 %v56
  %436 = vmatpush.msra.mxu0 %v54
  %437 = vmatpush.msra.mxu0 %v52
  %438 = vmatpush.msra.mxu0 %v50
  %439 = vmatpush.msra.mxu0 %v48
  %440 = vmatmul.f32.gmra.mxu0 %v422
  %v441 = vpop.f32.mrf.mxu0
  %v442 = vadd.f32 0.0, %v441
  %443 = vdwg.mxu0
  %444 = vmatpush.msra.mxu0 0.0
  %445 = vmatpush.msra.mxu0 0.0
  %446 = vmatpush.msra.mxu0 0.0
  %447 = vmatpush.msra.mxu0 0.0
  %448 = vmatpush.msra.mxu0 0.0
  %449 = vmatpush.msra.mxu0 0.0
  %450 = vmatpush.msra.mxu0 0.0
  %451 = vmatpush.msra.mxu0 0.0
  %452 = vmatpush.msra.mxu0 %v63
  %453 = vmatpush.msra.mxu0 %v61
  %454 = vmatpush.msra.mxu0 %v59
  %455 = vmatpush.msra.mxu0 %v57
  %456 = vmatpush.msra.mxu0 %v55
  %457 = vmatpush.msra.mxu0 %v53
  %458 = vmatpush.msra.mxu0 %v51
  %459 = vmatpush.msra.mxu0 %v49
  %460 = vmatmul.f32.gmra.mxu0 %v422
  %v461 = vpop.f32.mrf.mxu0
  %v462 = vadd.f32 0.0, %v461
  %463 = vdwg.mxu0
  %v464 = vadd.f32 %v123, %v442
  %v465 = vxor.u32 %v464, 2147483648
  %v466 = vmul.f32 %v465, 1.442695
  %v467 = vpow.pop %v466
  %v468 = vadd.f32 %v467, 1.0
  %v469 = vrcp.pop %v468
  %v470 = vmul.f32 %v468, %v469
  %v471 = vsub.f32 1.0, %v470
  %v472 = vmul.f32 %v469, %v471
  %v473 = vadd.f32 %v469, %v472
  %vm474 = vweird.f32 %v468
  %vm475 = vweird.f32 %v469
  %vm476 = vmor %vm474, %vm475
  %v477 = vsel %vm476, %v469, %v473
  %v478 = vand.u32 2147483647, %v468
  %vm479 = vcmp.eq.f32.partialorder %v478, 8.507059e+37
  %v480 = vand.u32 %v468, 2147483648
  %v481 = vor.u32 1.1754944e-38, %v480
  %v482 = vsel %vm479, %v481, %v477
  %v483 = vmul.f32 1.0, %v482
  %v484 = vadd.f32 %v462, %v243
  %v485 = vmul.f32 %v483, %v484
  %v486 = vadd.f32 %v164, %v485
  %v487 = vtanh.pop %v486
  %v488 = vsub.f32 1.0, %v483
  %490 = vrot.lane.b32.xlu0 %v487, 64
  %v491 = vpop.permute.xlu0 %490
  %v493 = vmul.f32 %v488, %v491
  %v494 = vmul.f32 %v483, %v415
  %v495 = vadd.f32 %v493, %v494
  %497 = vrot.lane.b32.xlu0 %v495, 64
  %v498 = vpop.permute.xlu0 %497
  %s500 = scalar_lea.vmem %s9, 24
  %501 = vst.msk [vmem:[%s500] sm:$0xff] %vm178, %v498
  %v502 = vsel %vm178, %v498, 0
  %504 = vmatpush.msra.mxu0 0.0
  %505 = vmatpush.msra.mxu0 0.0
  %506 = vmatpush.msra.mxu0 0.0
  %507 = vmatpush.msra.mxu0 0.0
  %508 = vmatpush.msra.mxu0 0.0
  %509 = vmatpush.msra.mxu0 0.0
  %510 = vmatpush.msra.mxu0 0.0
  %511 = vmatpush.msra.mxu0 0.0
  %512 = vmatpush.msra.mxu0 %v62
  %513 = vmatpush.msra.mxu0 %v60
  %514 = vmatpush.msra.mxu0 %v58
  %515 = vmatpush.msra.mxu0 %v56
  %516 = vmatpush.msra.mxu0 %v54
  %517 = vmatpush.msra.mxu0 %v52
  %518 = vmatpush.msra.mxu0 %v50
  %519 = vmatpush.msra.mxu0 %v48
  %520 = vmatmul.f32.gmra.mxu0 %v502
  %v521 = vpop.f32.mrf.mxu0
  %v522 = vadd.f32 0.0, %v521
  %523 = vdwg.mxu0
  %524 = vmatpush.msra.mxu0 0.0
  %525 = vmatpush.msra.mxu0 0.0
  %526 = vmatpush.msra.mxu0 0.0
  %527 = vmatpush.msra.mxu0 0.0
  %528 = vmatpush.msra.mxu0 0.0
  %529 = vmatpush.msra.mxu0 0.0
  %530 = vmatpush.msra.mxu0 0.0
  %531 = vmatpush.msra.mxu0 0.0
  %532 = vmatpush.msra.mxu0 %v63
  %533 = vmatpush.msra.mxu0 %v61
  %534 = vmatpush.msra.mxu0 %v59
  %535 = vmatpush.msra.mxu0 %v57
  %536 = vmatpush.msra.mxu0 %v55
  %537 = vmatpush.msra.mxu0 %v53
  %538 = vmatpush.msra.mxu0 %v51
  %539 = vmatpush.msra.mxu0 %v49
  %540 = vmatmul.f32.gmra.mxu0 %v502
  %v541 = vpop.f32.mrf.mxu0
  %v542 = vadd.f32 0.0, %v541
  %543 = vdwg.mxu0
  %v544 = vadd.f32 %v126, %v522
  %v545 = vxor.u32 %v544, 2147483648
  %v546 = vmul.f32 %v545, 1.442695
  %v547 = vpow.pop %v546
  %v548 = vadd.f32 %v547, 1.0
  %v549 = vrcp.pop %v548
  %v550 = vmul.f32 %v548, %v549
  %v551 = vsub.f32 1.0, %v550
  %v552 = vmul.f32 %v549, %v551
  %v553 = vadd.f32 %v549, %v552
  %vm554 = vweird.f32 %v548
  %vm555 = vweird.f32 %v549
  %vm556 = vmor %vm554, %vm555
  %v557 = vsel %vm556, %v549, %v553
  %v558 = vand.u32 2147483647, %v548
  %vm559 = vcmp.eq.f32.partialorder %v558, 8.507059e+37
  %v560 = vand.u32 %v548, 2147483648
  %v561 = vor.u32 1.1754944e-38, %v560
  %v562 = vsel %vm559, %v561, %v557
  %v563 = vmul.f32 1.0, %v562
  %v564 = vadd.f32 %v542, %v243
  %v565 = vmul.f32 %v563, %v564
  %v566 = vadd.f32 %v167, %v565
  %v567 = vtanh.pop %v566
  %v568 = vsub.f32 1.0, %v563
  %570 = vrot.lane.b32.xlu0 %v567, 64
  %v571 = vpop.permute.xlu0 %570
  %v573 = vmul.f32 %v568, %v571
  %v574 = vmul.f32 %v563, %v495
  %v575 = vadd.f32 %v573, %v574
  %577 = vrot.lane.b32.xlu0 %v575, 64
  %v578 = vpop.permute.xlu0 %577
  %s580 = scalar_lea.vmem %s9, 32
  %581 = vst.msk [vmem:[%s580] sm:$0xff] %vm178, %v578
  %v582 = vsel %vm178, %v578, 0
  %584 = vmatpush.msra.mxu0 0.0
  %585 = vmatpush.msra.mxu0 0.0
  %586 = vmatpush.msra.mxu0 0.0
  %587 = vmatpush.msra.mxu0 0.0
  %588 = vmatpush.msra.mxu0 0.0
  %589 = vmatpush.msra.mxu0 0.0
  %590 = vmatpush.msra.mxu0 0.0
  %591 = vmatpush.msra.mxu0 0.0
  %592 = vmatpush.msra.mxu0 %v62
  %593 = vmatpush.msra.mxu0 %v60
  %594 = vmatpush.msra.mxu0 %v58
  %595 = vmatpush.msra.mxu0 %v56
  %596 = vmatpush.msra.mxu0 %v54
  %597 = vmatpush.msra.mxu0 %v52
  %598 = vmatpush.msra.mxu0 %v50
  %599 = vmatpush.msra.mxu0 %v48
  %600 = vmatmul.f32.gmra.mxu0 %v582
  %v601 = vpop.f32.mrf.mxu0
  %v602 = vadd.f32 0.0, %v601
  %603 = vdwg.mxu0
  %604 = vmatpush.msra.mxu0 0.0
  %605 = vmatpush.msra.mxu0 0.0
  %606 = vmatpush.msra.mxu0 0.0
  %607 = vmatpush.msra.mxu0 0.0
  %608 = vmatpush.msra.mxu0 0.0
  %609 = vmatpush.msra.mxu0 0.0
  %610 = vmatpush.msra.mxu0 0.0
  %611 = vmatpush.msra.mxu0 0.0
  %612 = vmatpush.msra.mxu0 %v63
  %613 = vmatpush.msra.mxu0 %v61
  %614 = vmatpush.msra.mxu0 %v59
  %615 = vmatpush.msra.mxu0 %v57
  %616 = vmatpush.msra.mxu0 %v55
  %617 = vmatpush.msra.mxu0 %v53
  %618 = vmatpush.msra.mxu0 %v51
  %619 = vmatpush.msra.mxu0 %v49
  %620 = vmatmul.f32.gmra.mxu0 %v582
  %v621 = vpop.f32.mrf.mxu0
  %v622 = vadd.f32 0.0, %v621
  %623 = vdwg.mxu0
  %v624 = vadd.f32 %v129, %v602
  %v625 = vxor.u32 %v624, 2147483648
  %v626 = vmul.f32 %v625, 1.442695
  %v627 = vpow.pop %v626
  %v628 = vadd.f32 %v627, 1.0
  %v629 = vrcp.pop %v628
  %v630 = vmul.f32 %v628, %v629
  %v631 = vsub.f32 1.0, %v630
  %v632 = vmul.f32 %v629, %v631
  %v633 = vadd.f32 %v629, %v632
  %vm634 = vweird.f32 %v628
  %vm635 = vweird.f32 %v629
  %vm636 = vmor %vm634, %vm635
  %v637 = vsel %vm636, %v629, %v633
  %v638 = vand.u32 2147483647, %v628
  %vm639 = vcmp.eq.f32.partialorder %v638, 8.507059e+37
  %v640 = vand.u32 %v628, 2147483648
  %v641 = vor.u32 1.1754944e-38, %v640
  %v642 = vsel %vm639, %v641, %v637
  %v643 = vmul.f32 1.0, %v642
  %v644 = vadd.f32 %v622, %v243
  %v645 = vmul.f32 %v643, %v644
  %v646 = vadd.f32 %v170, %v645
  %v647 = vtanh.pop %v646
  %v648 = vsub.f32 1.0, %v643
  %650 = vrot.lane.b32.xlu0 %v647, 64
  %v651 = vpop.permute.xlu0 %650
  %v653 = vmul.f32 %v648, %v651
  %v654 = vmul.f32 %v643, %v575
  %v655 = vadd.f32 %v653, %v654
  %657 = vrot.lane.b32.xlu0 %v655, 64
  %v658 = vpop.permute.xlu0 %657
  %s660 = scalar_lea.vmem %s9, 40
  %661 = vst.msk [vmem:[%s660] sm:$0xff] %vm178, %v658
  %v662 = vsel %vm178, %v658, 0
  %664 = vmatpush.msra.mxu0 0.0
  %665 = vmatpush.msra.mxu0 0.0
  %666 = vmatpush.msra.mxu0 0.0
  %667 = vmatpush.msra.mxu0 0.0
  %668 = vmatpush.msra.mxu0 0.0
  %669 = vmatpush.msra.mxu0 0.0
  %670 = vmatpush.msra.mxu0 0.0
  %671 = vmatpush.msra.mxu0 0.0
  %672 = vmatpush.msra.mxu0 %v62
  %673 = vmatpush.msra.mxu0 %v60
  %674 = vmatpush.msra.mxu0 %v58
  %675 = vmatpush.msra.mxu0 %v56
  %676 = vmatpush.msra.mxu0 %v54
  %677 = vmatpush.msra.mxu0 %v52
  %678 = vmatpush.msra.mxu0 %v50
  %679 = vmatpush.msra.mxu0 %v48
  %680 = vmatmul.f32.gmra.mxu0 %v662
  %v681 = vpop.f32.mrf.mxu0
  %v682 = vadd.f32 0.0, %v681
  %683 = vdwg.mxu0
  %684 = vmatpush.msra.mxu0 0.0
  %685 = vmatpush.msra.mxu0 0.0
  %686 = vmatpush.msra.mxu0 0.0
  %687 = vmatpush.msra.mxu0 0.0
  %688 = vmatpush.msra.mxu0 0.0
  %689 = vmatpush.msra.mxu0 0.0
  %690 = vmatpush.msra.mxu0 0.0
  %691 = vmatpush.msra.mxu0 0.0
  %692 = vmatpush.msra.mxu0 %v63
  %693 = vmatpush.msra.mxu0 %v61
  %694 = vmatpush.msra.mxu0 %v59
  %695 = vmatpush.msra.mxu0 %v57
  %696 = vmatpush.msra.mxu0 %v55
  %697 = vmatpush.msra.mxu0 %v53
  %698 = vmatpush.msra.mxu0 %v51
  %699 = vmatpush.msra.mxu0 %v49
  %700 = vmatmul.f32.gmra.mxu0 %v662
  %v701 = vpop.f32.mrf.mxu0
  %v702 = vadd.f32 0.0, %v701
  %703 = vdwg.mxu0
  %v704 = vadd.f32 %v132, %v682
  %v705 = vxor.u32 %v704, 2147483648
  %v706 = vmul.f32 %v705, 1.442695
  %v707 = vpow.pop %v706
  %v708 = vadd.f32 %v707, 1.0
  %v709 = vrcp.pop %v708
  %v710 = vmul.f32 %v708, %v709
  %v711 = vsub.f32 1.0, %v710
  %v712 = vmul.f32 %v709, %v711
  %v713 = vadd.f32 %v709, %v712
  %vm714 = vweird.f32 %v708
  %vm715 = vweird.f32 %v709
  %vm716 = vmor %vm714, %vm715
  %v717 = vsel %vm716, %v709, %v713
  %v718 = vand.u32 2147483647, %v708
  %vm719 = vcmp.eq.f32.partialorder %v718, 8.507059e+37
  %v720 = vand.u32 %v708, 2147483648
  %v721 = vor.u32 1.1754944e-38, %v720
  %v722 = vsel %vm719, %v721, %v717
  %v723 = vmul.f32 1.0, %v722
  %v724 = vadd.f32 %v702, %v243
  %v725 = vmul.f32 %v723, %v724
  %v726 = vadd.f32 %v173, %v725
  %v727 = vtanh.pop %v726
  %v728 = vsub.f32 1.0, %v723
  %730 = vrot.lane.b32.xlu0 %v727, 64
  %v731 = vpop.permute.xlu0 %730
  %v733 = vmul.f32 %v728, %v731
  %v734 = vmul.f32 %v723, %v655
  %v735 = vadd.f32 %v733, %v734
  %737 = vrot.lane.b32.xlu0 %v735, 64
  %v738 = vpop.permute.xlu0 %737
  %s740 = scalar_lea.vmem %s9, 48
  %741 = vst.msk [vmem:[%s740] sm:$0xff] %vm178, %v738
  %v742 = vsel %vm178, %v738, 0
  %744 = vmatpush.msra.mxu0 0.0
  %745 = vmatpush.msra.mxu0 0.0
  %746 = vmatpush.msra.mxu0 0.0
  %747 = vmatpush.msra.mxu0 0.0
  %748 = vmatpush.msra.mxu0 0.0
  %749 = vmatpush.msra.mxu0 0.0
  %750 = vmatpush.msra.mxu0 0.0
  %751 = vmatpush.msra.mxu0 0.0
  %752 = vmatpush.msra.mxu0 %v62
  %753 = vmatpush.msra.mxu0 %v60
  %754 = vmatpush.msra.mxu0 %v58
  %755 = vmatpush.msra.mxu0 %v56
  %756 = vmatpush.msra.mxu0 %v54
  %757 = vmatpush.msra.mxu0 %v52
  %758 = vmatpush.msra.mxu0 %v50
  %759 = vmatpush.msra.mxu0 %v48
  %760 = vmatmul.f32.gmra.mxu0 %v742
  %v761 = vpop.f32.mrf.mxu0
  %v762 = vadd.f32 0.0, %v761
  %763 = vdwg.mxu0
  %764 = vmatpush.msra.mxu0 0.0
  %765 = vmatpush.msra.mxu0 0.0
  %766 = vmatpush.msra.mxu0 0.0
  %767 = vmatpush.msra.mxu0 0.0
  %768 = vmatpush.msra.mxu0 0.0
  %769 = vmatpush.msra.mxu0 0.0
  %770 = vmatpush.msra.mxu0 0.0
  %771 = vmatpush.msra.mxu0 0.0
  %772 = vmatpush.msra.mxu0 %v63
  %773 = vmatpush.msra.mxu0 %v61
  %774 = vmatpush.msra.mxu0 %v59
  %775 = vmatpush.msra.mxu0 %v57
  %776 = vmatpush.msra.mxu0 %v55
  %777 = vmatpush.msra.mxu0 %v53
  %778 = vmatpush.msra.mxu0 %v51
  %779 = vmatpush.msra.mxu0 %v49
  %780 = vmatmul.f32.gmra.mxu0 %v742
  %v781 = vpop.f32.mrf.mxu0
  %v782 = vadd.f32 0.0, %v781
  %783 = vdwg.mxu0
  %v784 = vadd.f32 %v135, %v762
  %v785 = vxor.u32 %v784, 2147483648
  %v786 = vmul.f32 %v785, 1.442695
  %v787 = vpow.pop %v786
  %v788 = vadd.f32 %v787, 1.0
  %v789 = vrcp.pop %v788
  %v790 = vmul.f32 %v788, %v789
  %v791 = vsub.f32 1.0, %v790
  %v792 = vmul.f32 %v789, %v791
  %v793 = vadd.f32 %v789, %v792
  %vm794 = vweird.f32 %v788
  %vm795 = vweird.f32 %v789
  %vm796 = vmor %vm794, %vm795
  %v797 = vsel %vm796, %v789, %v793
  %v798 = vand.u32 2147483647, %v788
  %vm799 = vcmp.eq.f32.partialorder %v798, 8.507059e+37
  %v800 = vand.u32 %v788, 2147483648
  %v801 = vor.u32 1.1754944e-38, %v800
  %v802 = vsel %vm799, %v801, %v797
  %v803 = vmul.f32 1.0, %v802
  %v804 = vadd.f32 %v782, %v243
  %v805 = vmul.f32 %v803, %v804
  %v806 = vadd.f32 %v176, %v805
  %v807 = vtanh.pop %v806
  %v808 = vsub.f32 1.0, %v803
  %810 = vrot.lane.b32.xlu0 %v807, 64
  %v811 = vpop.permute.xlu0 %810
  %v813 = vmul.f32 %v808, %v811
  %v814 = vmul.f32 %v803, %v735
  %v815 = vadd.f32 %v813, %v814
  %817 = vrot.lane.b32.xlu0 %v815, 64
  %v818 = vpop.permute.xlu0 %817
  %s820 = scalar_lea.vmem %s9, 56
  %821 = vst.msk [vmem:[%s820] sm:$0xff] %vm178, %v818
  %822 = vst.msk [vmem:[%s11] sm:$0xff] %vm178, %v818
  %v823 = vld [vmem:[%s9] sm:$0xff]
  %v824 = vld [vmem:[%s9 + $0x8] sm:$0xff]
  %v825 = vld [vmem:[%s9 + $0x10] sm:$0xff]
  %v826 = vld [vmem:[%s9 + $0x18] sm:$0xff]
  %v827 = vld [vmem:[%s9 + $0x20] sm:$0xff]
  %v828 = vld [vmem:[%s9 + $0x28] sm:$0xff]
  %v829 = vld [vmem:[%s9 + $0x30] sm:$0xff]
  %v830 = vld [vmem:[%s9 + $0x38] sm:$0xff]
  %v831 = vld [vmem:[%s5] sm:$0xff]
  %v832 = vld [vmem:[%s5 + $0x8] sm:$0xff]
  %v833 = vld [vmem:[%s5 + $0x10] sm:$0xff]
  %v834 = vld [vmem:[%s5 + $0x18] sm:$0xff]
  %v835 = vld [vmem:[%s5 + $0x20] sm:$0xff]
  %v836 = vld [vmem:[%s5 + $0x28] sm:$0xff]
  %v837 = vld [vmem:[%s5 + $0x30] sm:$0xff]
  %v838 = vld [vmem:[%s5 + $0x38] sm:$0xff]
  %v839 = vld [vmem:[%s5 + $0x40] sm:$0xff]
  %v840 = vld [vmem:[%s5 + $0x48] sm:$0xff]
  %v841 = vld [vmem:[%s5 + $0x50] sm:$0xff]
  %v842 = vld [vmem:[%s5 + $0x58] sm:$0xff]
  %v843 = vld [vmem:[%s5 + $0x60] sm:$0xff]
  %v844 = vld [vmem:[%s5 + $0x68] sm:$0xff]
  %v845 = vld [vmem:[%s5 + $0x70] sm:$0xff]
  %v846 = vld [vmem:[%s5 + $0x78] sm:$0xff]
  %v847 = vld [vmem:[%s6] sm:$0xff]
  %v848 = vld [vmem:[%s6 + $0x8] sm:$0xff]
  %v849 = vld [vmem:[%s6 + $0x10] sm:$0xff]
  %v850 = vld [vmem:[%s6 + $0x18] sm:$0xff]
  %v851 = vld [vmem:[%s6 + $0x20] sm:$0xff]
  %v852 = vld [vmem:[%s6 + $0x28] sm:$0xff]
  %v853 = vld [vmem:[%s6 + $0x30] sm:$0xff]
  %v854 = vld [vmem:[%s6 + $0x38] sm:$0xff]
  %v855 = vld [vmem:[%s6 + $0x40] sm:$0xff]
  %v856 = vld [vmem:[%s6 + $0x48] sm:$0xff]
  %v857 = vld [vmem:[%s6 + $0x50] sm:$0xff]
  %v858 = vld [vmem:[%s6 + $0x58] sm:$0xff]
  %v859 = vld [vmem:[%s6 + $0x60] sm:$0xff]
  %v860 = vld [vmem:[%s6 + $0x68] sm:$0xff]
  %v861 = vld [vmem:[%s6 + $0x70] sm:$0xff]
  %v862 = vld [vmem:[%s6 + $0x78] sm:$0xff]
  %v863 = vld [vmem:[%s7] sm:$0x3]
  %v864 = vld [vmem:[%s8] sm:$0x1]
  %v866 = vperm.slane %v863, 0
  %v867 = vperm.slane %v863, 1
  %v871 = vsel %vm178, %v823, 0
  %v874 = vsel %vm178, %v824, 0
  %v877 = vsel %vm178, %v825, 0
  %v880 = vsel %vm178, %v826, 0
  %v883 = vsel %vm178, %v827, 0
  %v886 = vsel %vm178, %v828, 0
  %v889 = vsel %vm178, %v829, 0
  %v892 = vsel %vm178, %v830, 0
  %894 = vmatpush.msra.mxu0 0.0
  %895 = vmatpush.msra.mxu0 0.0
  %896 = vmatpush.msra.mxu0 0.0
  %897 = vmatpush.msra.mxu0 0.0
  %898 = vmatpush.msra.mxu0 0.0
  %899 = vmatpush.msra.mxu0 0.0
  %900 = vmatpush.msra.mxu0 0.0
  %901 = vmatpush.msra.mxu0 0.0
  %902 = vmatpush.msra.mxu0 %v845
  %903 = vmatpush.msra.mxu0 %v843
  %904 = vmatpush.msra.mxu0 %v841
  %905 = vmatpush.msra.mxu0 %v839
  %906 = vmatpush.msra.mxu0 %v837
  %907 = vmatpush.msra.mxu0 %v835
  %908 = vmatpush.msra.mxu0 %v833
  %909 = vmatpush.msra.mxu0 %v831
  %910 = vmatmul.f32.gmra.mxu0 %v871
  %v911 = vpop.f32.mrf.mxu0
  %v912 = vadd.f32 %v866, %v911
  %913 = vmatmul.f32.gmra.mxu0 %v874
  %v914 = vpop.f32.mrf.mxu0
  %v915 = vadd.f32 %v866, %v914
  %916 = vmatmul.f32.gmra.mxu0 %v877
  %v917 = vpop.f32.mrf.mxu0
  %v918 = vadd.f32 %v866, %v917
  %919 = vmatmul.f32.gmra.mxu0 %v880
  %v920 = vpop.f32.mrf.mxu0
  %v921 = vadd.f32 %v866, %v920
  %922 = vmatmul.f32.gmra.mxu0 %v883
  %v923 = vpop.f32.mrf.mxu0
  %v924 = vadd.f32 %v866, %v923
  %925 = vmatmul.f32.gmra.mxu0 %v886
  %v926 = vpop.f32.mrf.mxu0
  %v927 = vadd.f32 %v866, %v926
  %928 = vmatmul.f32.gmra.mxu0 %v889
  %v929 = vpop.f32.mrf.mxu0
  %v930 = vadd.f32 %v866, %v929
  %931 = vmatmul.f32.gmra.mxu0 %v892
  %v932 = vpop.f32.mrf.mxu0
  %v933 = vadd.f32 %v866, %v932
  %934 = vdwg.mxu0
  %935 = vmatpush.msra.mxu0 0.0
  %936 = vmatpush.msra.mxu0 0.0
  %937 = vmatpush.msra.mxu0 0.0
  %938 = vmatpush.msra.mxu0 0.0
  %939 = vmatpush.msra.mxu0 0.0
  %940 = vmatpush.msra.mxu0 0.0
  %941 = vmatpush.msra.mxu0 0.0
  %942 = vmatpush.msra.mxu0 0.0
  %943 = vmatpush.msra.mxu0 %v846
  %944 = vmatpush.msra.mxu0 %v844
  %945 = vmatpush.msra.mxu0 %v842
  %946 = vmatpush.msra.mxu0 %v840
  %947 = vmatpush.msra.mxu0 %v838
  %948 = vmatpush.msra.mxu0 %v836
  %949 = vmatpush.msra.mxu0 %v834
  %950 = vmatpush.msra.mxu0 %v832
  %951 = vmatmul.f32.gmra.mxu0 %v871
  %v952 = vpop.f32.mrf.mxu0
  %v953 = vadd.f32 %v867, %v952
  %954 = vmatmul.f32.gmra.mxu0 %v874
  %v955 = vpop.f32.mrf.mxu0
  %v956 = vadd.f32 %v867, %v955
  %957 = vmatmul.f32.gmra.mxu0 %v877
  %v958 = vpop.f32.mrf.mxu0
  %v959 = vadd.f32 %v867, %v958
  %960 = vmatmul.f32.gmra.mxu0 %v880
  %v961 = vpop.f32.mrf.mxu0
  %v962 = vadd.f32 %v867, %v961
  %963 = vmatmul.f32.gmra.mxu0 %v883
  %v964 = vpop.f32.mrf.mxu0
  %v965 = vadd.f32 %v867, %v964
  %966 = vmatmul.f32.gmra.mxu0 %v886
  %v967 = vpop.f32.mrf.mxu0
  %v968 = vadd.f32 %v867, %v967
  %969 = vmatmul.f32.gmra.mxu0 %v889
  %v970 = vpop.f32.mrf.mxu0
  %v971 = vadd.f32 %v867, %v970
  %972 = vmatmul.f32.gmra.mxu0 %v892
  %v973 = vpop.f32.mrf.mxu0
  %v974 = vadd.f32 %v867, %v973
  %975 = vdwg.mxu0
  %976 = vmatpush.msra.mxu0 0.0
  %977 = vmatpush.msra.mxu0 0.0
  %978 = vmatpush.msra.mxu0 0.0
  %979 = vmatpush.msra.mxu0 0.0
  %980 = vmatpush.msra.mxu0 0.0
  %981 = vmatpush.msra.mxu0 0.0
  %982 = vmatpush.msra.mxu0 0.0
  %983 = vmatpush.msra.mxu0 0.0
  %984 = vmatpush.msra.mxu0 %v861
  %985 = vmatpush.msra.mxu0 %v859
  %986 = vmatpush.msra.mxu0 %v857
  %987 = vmatpush.msra.mxu0 %v855
  %988 = vmatpush.msra.mxu0 %v853
  %989 = vmatpush.msra.mxu0 %v851
  %990 = vmatpush.msra.mxu0 %v849
  %991 = vmatpush.msra.mxu0 %v847
  %992 = vmatmul.f32.gmra.mxu0 %v180
  %v993 = vpop.f32.mrf.mxu0
  %v994 = vadd.f32 0.0, %v993
  %995 = vmatmul.f32.gmra.mxu0 %v180
  %v996 = vpop.f32.mrf.mxu0
  %v997 = vadd.f32 0.0, %v996
  %998 = vdwg.mxu0
  %999 = vmatpush.msra.mxu0 0.0
  %1000 = vmatpush.msra.mxu0 0.0
  %1001 = vmatpush.msra.mxu0 0.0
  %1002 = vmatpush.msra.mxu0 0.0
  %1003 = vmatpush.msra.mxu0 0.0
  %1004 = vmatpush.msra.mxu0 0.0
  %1005 = vmatpush.msra.mxu0 0.0
  %1006 = vmatpush.msra.mxu0 0.0
  %1007 = vmatpush.msra.mxu0 %v862
  %1008 = vmatpush.msra.mxu0 %v860
  %1009 = vmatpush.msra.mxu0 %v858
  %1010 = vmatpush.msra.mxu0 %v856
  %1011 = vmatpush.msra.mxu0 %v854
  %1012 = vmatpush.msra.mxu0 %v852
  %1013 = vmatpush.msra.mxu0 %v850
  %1014 = vmatpush.msra.mxu0 %v848
  %1015 = vmatmul.f32.gmra.mxu0 %v180
  %v1016 = vpop.f32.mrf.mxu0
  %v1017 = vadd.f32 0.0, %v1016
  %1018 = vmatmul.f32.gmra.mxu0 %v180
  %v1019 = vpop.f32.mrf.mxu0
  %v1020 = vadd.f32 0.0, %v1019
  %1021 = vdwg.mxu0
  %v1022 = vadd.f32 %v912, %v994
  %v1023 = vadd.f32 %v915, %v997
  %v1024 = vxor.u32 %v1022, 2147483648
  %v1025 = vxor.u32 %v1023, 2147483648
  %v1026 = vmul.f32 %v1024, 1.442695
  %v1027 = vpow.pop %v1026
  %v1028 = vmul.f32 %v1025, 1.442695
  %v1029 = vpow.pop %v1028
  %v1030 = vadd.f32 %v1027, 1.0
  %v1031 = vadd.f32 %v1029, 1.0
  %v1032 = vrcp.pop %v1030
  %v1033 = vmul.f32 %v1030, %v1032
  %v1034 = vsub.f32 1.0, %v1033
  %v1035 = vmul.f32 %v1032, %v1034
  %v1036 = vadd.f32 %v1032, %v1035
  %vm1037 = vweird.f32 %v1030
  %vm1038 = vweird.f32 %v1032
  %vm1039 = vmor %vm1037, %vm1038
  %v1040 = vsel %vm1039, %v1032, %v1036
  %v1041 = vand.u32 2147483647, %v1030
  %vm1042 = vcmp.eq.f32.partialorder %v1041, 8.507059e+37
  %v1043 = vand.u32 %v1030, 2147483648
  %v1044 = vor.u32 1.1754944e-38, %v1043
  %v1045 = vsel %vm1042, %v1044, %v1040
  %v1046 = vmul.f32 1.0, %v1045
  %v1047 = vrcp.pop %v1031
  %v1048 = vmul.f32 %v1031, %v1047
  %v1049 = vsub.f32 1.0, %v1048
  %v1050 = vmul.f32 %v1047, %v1049
  %v1051 = vadd.f32 %v1047, %v1050
  %vm1052 = vweird.f32 %v1031
  %vm1053 = vweird.f32 %v1047
  %vm1054 = vmor %vm1052, %vm1053
  %v1055 = vsel %vm1054, %v1047, %v1051
  %v1056 = vand.u32 2147483647, %v1031
  %vm1057 = vcmp.eq.f32.partialorder %v1056, 8.507059e+37
  %v1058 = vand.u32 %v1031, 2147483648
  %v1059 = vor.u32 1.1754944e-38, %v1058
  %v1060 = vsel %vm1057, %v1059, %v1055
  %v1061 = vmul.f32 1.0, %v1060
  %v1063 = vperm.slane %v864, 0
  %v1065 = vadd.f32 %v1017, %v1063
  %v1066 = vadd.f32 %v1020, %v1063
  %v1067 = vmul.f32 %v1046, %v1065
  %v1068 = vmul.f32 %v1061, %v1066
  %v1069 = vadd.f32 %v953, %v1067
  %v1070 = vadd.f32 %v956, %v1068
  %v1071 = vtanh.pop %v1069
  %v1072 = vtanh.pop %v1070
  %v1073 = vsub.f32 1.0, %v1046
  %v1074 = vsub.f32 1.0, %v1061
  %1077 = vrot.lane.b32.xlu0 %v1071, 64
  %v1078 = vpop.permute.xlu0 %1077
  %1079 = vrot.lane.b32.xlu0 %v1072, 64
  %v1080 = vpop.permute.xlu0 %1079
  %v1083 = vmul.f32 %v1073, %v1078
  %v1084 = vmul.f32 %v1074, %v1080
  %v1085 = vmul.f32 %v1046, 0.0
  %v1086 = vmul.f32 %v1061, 0.0
  %v1087 = vadd.f32 %v1083, %v1085
  %v1088 = vadd.f32 %v1084, %v1086
  %1091 = vrot.lane.b32.xlu0 %v1087, 64
  %v1092 = vpop.permute.xlu0 %1091
  %1093 = vrot.lane.b32.xlu0 %v1088, 64
  %v1094 = vpop.permute.xlu0 %1093
  %1097 = vst.msk [vmem:[%s10] sm:$0xff] %vm178, %v1092
  %1098 = vst.msk [vmem:[%s10 + $0x8] sm:$0xff] %vm178, %v1094
  %v1099 = vsel %vm178, %v1092, 0
  %v1101 = vsel %vm178, %v1094, 0
  %1103 = vmatpush.msra.mxu0 0.0
  %1104 = vmatpush.msra.mxu0 0.0
  %1105 = vmatpush.msra.mxu0 0.0
  %1106 = vmatpush.msra.mxu0 0.0
  %1107 = vmatpush.msra.mxu0 0.0
  %1108 = vmatpush.msra.mxu0 0.0
  %1109 = vmatpush.msra.mxu0 0.0
  %1110 = vmatpush.msra.mxu0 0.0
  %1111 = vmatpush.msra.mxu0 %v861
  %1112 = vmatpush.msra.mxu0 %v859
  %1113 = vmatpush.msra.mxu0 %v857
  %1114 = vmatpush.msra.mxu0 %v855
  %1115 = vmatpush.msra.mxu0 %v853
  %1116 = vmatpush.msra.mxu0 %v851
  %1117 = vmatpush.msra.mxu0 %v849
  %1118 = vmatpush.msra.mxu0 %v847
  %1119 = vmatmul.f32.gmra.mxu0 %v1099
  %v1120 = vpop.f32.mrf.mxu0
  %v1121 = vadd.f32 0.0, %v1120
  %1122 = vmatmul.f32.gmra.mxu0 %v1101
  %v1123 = vpop.f32.mrf.mxu0
  %v1124 = vadd.f32 0.0, %v1123
  %1125 = vdwg.mxu0
  %1126 = vmatpush.msra.mxu0 0.0
  %1127 = vmatpush.msra.mxu0 0.0
  %1128 = vmatpush.msra.mxu0 0.0
  %1129 = vmatpush.msra.mxu0 0.0
  %1130 = vmatpush.msra.mxu0 0.0
  %1131 = vmatpush.msra.mxu0 0.0
  %1132 = vmatpush.msra.mxu0 0.0
  %1133 = vmatpush.msra.mxu0 0.0
  %1134 = vmatpush.msra.mxu0 %v862
  %1135 = vmatpush.msra.mxu0 %v860
  %1136 = vmatpush.msra.mxu0 %v858
  %1137 = vmatpush.msra.mxu0 %v856
  %1138 = vmatpush.msra.mxu0 %v854
  %1139 = vmatpush.msra.mxu0 %v852
  %1140 = vmatpush.msra.mxu0 %v850
  %1141 = vmatpush.msra.mxu0 %v848
  %1142 = vmatmul.f32.gmra.mxu0 %v1099
  %v1143 = vpop.f32.mrf.mxu0
  %v1144 = vadd.f32 0.0, %v1143
  %1145 = vmatmul.f32.gmra.mxu0 %v1101
  %v1146 = vpop.f32.mrf.mxu0
  %v1147 = vadd.f32 0.0, %v1146
  %1148 = vdwg.mxu0
  %v1149 = vadd.f32 %v918, %v1121
  %v1150 = vadd.f32 %v921, %v1124
  %v1151 = vxor.u32 %v1149, 2147483648
  %v1152 = vxor.u32 %v1150, 2147483648
  %v1153 = vmul.f32 %v1151, 1.442695
  %v1154 = vpow.pop %v1153
  %v1155 = vmul.f32 %v1152, 1.442695
  %v1156 = vpow.pop %v1155
  %v1157 = vadd.f32 %v1154, 1.0
  %v1158 = vadd.f32 %v1156, 1.0
  %v1159 = vrcp.pop %v1157
  %v1160 = vmul.f32 %v1157, %v1159
  %v1161 = vsub.f32 1.0, %v1160
  %v1162 = vmul.f32 %v1159, %v1161
  %v1163 = vadd.f32 %v1159, %v1162
  %vm1164 = vweird.f32 %v1157
  %vm1165 = vweird.f32 %v1159
  %vm1166 = vmor %vm1164, %vm1165
  %v1167 = vsel %vm1166, %v1159, %v1163
  %v1168 = vand.u32 2147483647, %v1157
  %vm1169 = vcmp.eq.f32.partialorder %v1168, 8.507059e+37
  %v1170 = vand.u32 %v1157, 2147483648
  %v1171 = vor.u32 1.1754944e-38, %v1170
  %v1172 = vsel %vm1169, %v1171, %v1167
  %v1173 = vmul.f32 1.0, %v1172
  %v1174 = vrcp.pop %v1158
  %v1175 = vmul.f32 %v1158, %v1174
  %v1176 = vsub.f32 1.0, %v1175
  %v1177 = vmul.f32 %v1174, %v1176
  %v1178 = vadd.f32 %v1174, %v1177
  %vm1179 = vweird.f32 %v1158
  %vm1180 = vweird.f32 %v1174
  %vm1181 = vmor %vm1179, %vm1180
  %v1182 = vsel %vm1181, %v1174, %v1178
  %v1183 = vand.u32 2147483647, %v1158
  %vm1184 = vcmp.eq.f32.partialorder %v1183, 8.507059e+37
  %v1185 = vand.u32 %v1158, 2147483648
  %v1186 = vor.u32 1.1754944e-38, %v1185
  %v1187 = vsel %vm1184, %v1186, %v1182
  %v1188 = vmul.f32 1.0, %v1187
  %v1189 = vadd.f32 %v1144, %v1063
  %v1190 = vadd.f32 %v1147, %v1063
  %v1191 = vmul.f32 %v1173, %v1189
  %v1192 = vmul.f32 %v1188, %v1190
  %v1193 = vadd.f32 %v959, %v1191
  %v1194 = vadd.f32 %v962, %v1192
  %v1195 = vtanh.pop %v1193
  %v1196 = vtanh.pop %v1194
  %v1197 = vsub.f32 1.0, %v1173
  %v1198 = vsub.f32 1.0, %v1188
  %1201 = vrot.lane.b32.xlu0 %v1195, 64
  %v1202 = vpop.permute.xlu0 %1201
  %1203 = vrot.lane.b32.xlu0 %v1196, 64
  %v1204 = vpop.permute.xlu0 %1203
  %v1207 = vmul.f32 %v1197, %v1202
  %v1208 = vmul.f32 %v1198, %v1204
  %v1209 = vmul.f32 %v1173, %v1087
  %v1210 = vmul.f32 %v1188, %v1088
  %v1211 = vadd.f32 %v1207, %v1209
  %v1212 = vadd.f32 %v1208, %v1210
  %1215 = vrot.lane.b32.xlu0 %v1211, 64
  %v1216 = vpop.permute.xlu0 %1215
  %1217 = vrot.lane.b32.xlu0 %v1212, 64
  %v1218 = vpop.permute.xlu0 %1217
  %s1221 = scalar_lea.vmem %s10, 16
  %1222 = vst.msk [vmem:[%s1221] sm:$0xff] %vm178, %v1216
  %1223 = vst.msk [vmem:[%s1221 + $0x8] sm:$0xff] %vm178, %v1218
  %v1224 = vsel %vm178, %v1216, 0
  %v1226 = vsel %vm178, %v1218, 0
  %1228 = vmatpush.msra.mxu0 0.0
  %1229 = vmatpush.msra.mxu0 0.0
  %1230 = vmatpush.msra.mxu0 0.0
  %1231 = vmatpush.msra.mxu0 0.0
  %1232 = vmatpush.msra.mxu0 0.0
  %1233 = vmatpush.msra.mxu0 0.0
  %1234 = vmatpush.msra.mxu0 0.0
  %1235 = vmatpush.msra.mxu0 0.0
  %1236 = vmatpush.msra.mxu0 %v861
  %1237 = vmatpush.msra.mxu0 %v859
  %1238 = vmatpush.msra.mxu0 %v857
  %1239 = vmatpush.msra.mxu0 %v855
  %1240 = vmatpush.msra.mxu0 %v853
  %1241 = vmatpush.msra.mxu0 %v851
  %1242 = vmatpush.msra.mxu0 %v849
  %1243 = vmatpush.msra.mxu0 %v847
  %1244 = vmatmul.f32.gmra.mxu0 %v1224
  %v1245 = vpop.f32.mrf.mxu0
  %v1246 = vadd.f32 0.0, %v1245
  %1247 = vmatmul.f32.gmra.mxu0 %v1226
  %v1248 = vpop.f32.mrf.mxu0
  %v1249 = vadd.f32 0.0, %v1248
  %1250 = vdwg.mxu0
  %1251 = vmatpush.msra.mxu0 0.0
  %1252 = vmatpush.msra.mxu0 0.0
  %1253 = vmatpush.msra.mxu0 0.0
  %1254 = vmatpush.msra.mxu0 0.0
  %1255 = vmatpush.msra.mxu0 0.0
  %1256 = vmatpush.msra.mxu0 0.0
  %1257 = vmatpush.msra.mxu0 0.0
  %1258 = vmatpush.msra.mxu0 0.0
  %1259 = vmatpush.msra.mxu0 %v862
  %1260 = vmatpush.msra.mxu0 %v860
  %1261 = vmatpush.msra.mxu0 %v858
  %1262 = vmatpush.msra.mxu0 %v856
  %1263 = vmatpush.msra.mxu0 %v854
  %1264 = vmatpush.msra.mxu0 %v852
  %1265 = vmatpush.msra.mxu0 %v850
  %1266 = vmatpush.msra.mxu0 %v848
  %1267 = vmatmul.f32.gmra.mxu0 %v1224
  %v1268 = vpop.f32.mrf.mxu0
  %v1269 = vadd.f32 0.0, %v1268
  %1270 = vmatmul.f32.gmra.mxu0 %v1226
  %v1271 = vpop.f32.mrf.mxu0
  %v1272 = vadd.f32 0.0, %v1271
  %1273 = vdwg.mxu0
  %v1274 = vadd.f32 %v924, %v1246
  %v1275 = vadd.f32 %v927, %v1249
  %v1276 = vxor.u32 %v1274, 2147483648
  %v1277 = vxor.u32 %v1275, 2147483648
  %v1278 = vmul.f32 %v1276, 1.442695
  %v1279 = vpow.pop %v1278
  %v1280 = vmul.f32 %v1277, 1.442695
  %v1281 = vpow.pop %v1280
  %v1282 = vadd.f32 %v1279, 1.0
  %v1283 = vadd.f32 %v1281, 1.0
  %v1284 = vrcp.pop %v1282
  %v1285 = vmul.f32 %v1282, %v1284
  %v1286 = vsub.f32 1.0, %v1285
  %v1287 = vmul.f32 %v1284, %v1286
  %v1288 = vadd.f32 %v1284, %v1287
  %vm1289 = vweird.f32 %v1282
  %vm1290 = vweird.f32 %v1284
  %vm1291 = vmor %vm1289, %vm1290
  %v1292 = vsel %vm1291, %v1284, %v1288
  %v1293 = vand.u32 2147483647, %v1282
  %vm1294 = vcmp.eq.f32.partialorder %v1293, 8.507059e+37
  %v1295 = vand.u32 %v1282, 2147483648
  %v1296 = vor.u32 1.1754944e-38, %v1295
  %v1297 = vsel %vm1294, %v1296, %v1292
  %v1298 = vmul.f32 1.0, %v1297
  %v1299 = vrcp.pop %v1283
  %v1300 = vmul.f32 %v1283, %v1299
  %v1301 = vsub.f32 1.0, %v1300
  %v1302 = vmul.f32 %v1299, %v1301
  %v1303 = vadd.f32 %v1299, %v1302
  %vm1304 = vweird.f32 %v1283
  %vm1305 = vweird.f32 %v1299
  %vm1306 = vmor %vm1304, %vm1305
  %v1307 = vsel %vm1306, %v1299, %v1303
  %v1308 = vand.u32 2147483647, %v1283
  %vm1309 = vcmp.eq.f32.partialorder %v1308, 8.507059e+37
  %v1310 = vand.u32 %v1283, 2147483648
  %v1311 = vor.u32 1.1754944e-38, %v1310
  %v1312 = vsel %vm1309, %v1311, %v1307
  %v1313 = vmul.f32 1.0, %v1312
  %v1314 = vadd.f32 %v1269, %v1063
  %v1315 = vadd.f32 %v1272, %v1063
  %v1316 = vmul.f32 %v1298, %v1314
  %v1317 = vmul.f32 %v1313, %v1315
  %v1318 = vadd.f32 %v965, %v1316
  %v1319 = vadd.f32 %v968, %v1317
  %v1320 = vtanh.pop %v1318
  %v1321 = vtanh.pop %v1319
  %v1322 = vsub.f32 1.0, %v1298
  %v1323 = vsub.f32 1.0, %v1313
  %1326 = vrot.lane.b32.xlu0 %v1320, 64
  %v1327 = vpop.permute.xlu0 %1326
  %1328 = vrot.lane.b32.xlu0 %v1321, 64
  %v1329 = vpop.permute.xlu0 %1328
  %v1332 = vmul.f32 %v1322, %v1327
  %v1333 = vmul.f32 %v1323, %v1329
  %v1334 = vmul.f32 %v1298, %v1211
  %v1335 = vmul.f32 %v1313, %v1212
  %v1336 = vadd.f32 %v1332, %v1334
  %v1337 = vadd.f32 %v1333, %v1335
  %1340 = vrot.lane.b32.xlu0 %v1336, 64
  %v1341 = vpop.permute.xlu0 %1340
  %1342 = vrot.lane.b32.xlu0 %v1337, 64
  %v1343 = vpop.permute.xlu0 %1342
  %s1346 = scalar_lea.vmem %s10, 32
  %1347 = vst.msk [vmem:[%s1346] sm:$0xff] %vm178, %v1341
  %1348 = vst.msk [vmem:[%s1346 + $0x8] sm:$0xff] %vm178, %v1343
  %v1349 = vsel %vm178, %v1341, 0
  %v1351 = vsel %vm178, %v1343, 0
  %1353 = vmatpush.msra.mxu0 0.0
  %1354 = vmatpush.msra.mxu0 0.0
  %1355 = vmatpush.msra.mxu0 0.0
  %1356 = vmatpush.msra.mxu0 0.0
  %1357 = vmatpush.msra.mxu0 0.0
  %1358 = vmatpush.msra.mxu0 0.0
  %1359 = vmatpush.msra.mxu0 0.0
  %1360 = vmatpush.msra.mxu0 0.0
  %1361 = vmatpush.msra.mxu0 %v861
  %1362 = vmatpush.msra.mxu0 %v859
  %1363 = vmatpush.msra.mxu0 %v857
  %1364 = vmatpush.msra.mxu0 %v855
  %1365 = vmatpush.msra.mxu0 %v853
  %1366 = vmatpush.msra.mxu0 %v851
  %1367 = vmatpush.msra.mxu0 %v849
  %1368 = vmatpush.msra.mxu0 %v847
  %1369 = vmatmul.f32.gmra.mxu0 %v1349
  %v1370 = vpop.f32.mrf.mxu0
  %v1371 = vadd.f32 0.0, %v1370
  %1372 = vmatmul.f32.gmra.mxu0 %v1351
  %v1373 = vpop.f32.mrf.mxu0
  %v1374 = vadd.f32 0.0, %v1373
  %1375 = vdwg.mxu0
  %1376 = vmatpush.msra.mxu0 0.0
  %1377 = vmatpush.msra.mxu0 0.0
  %1378 = vmatpush.msra.mxu0 0.0
  %1379 = vmatpush.msra.mxu0 0.0
  %1380 = vmatpush.msra.mxu0 0.0
  %1381 = vmatpush.msra.mxu0 0.0
  %1382 = vmatpush.msra.mxu0 0.0
  %1383 = vmatpush.msra.mxu0 0.0
  %1384 = vmatpush.msra.mxu0 %v862
  %1385 = vmatpush.msra.mxu0 %v860
  %1386 = vmatpush.msra.mxu0 %v858
  %1387 = vmatpush.msra.mxu0 %v856
  %1388 = vmatpush.msra.mxu0 %v854
  %1389 = vmatpush.msra.mxu0 %v852
  %1390 = vmatpush.msra.mxu0 %v850
  %1391 = vmatpush.msra.mxu0 %v848
  %1392 = vmatmul.f32.gmra.mxu0 %v1349
  %v1393 = vpop.f32.mrf.mxu0
  %v1394 = vadd.f32 0.0, %v1393
  %1395 = vmatmul.f32.gmra.mxu0 %v1351
  %v1396 = vpop.f32.mrf.mxu0
  %v1397 = vadd.f32 0.0, %v1396
  %1398 = vdwg.mxu0
  %v1399 = vadd.f32 %v930, %v1371
  %v1400 = vadd.f32 %v933, %v1374
  %v1401 = vxor.u32 %v1399, 2147483648
  %v1402 = vxor.u32 %v1400, 2147483648
  %v1403 = vmul.f32 %v1401, 1.442695
  %v1404 = vpow.pop %v1403
  %v1405 = vmul.f32 %v1402, 1.442695
  %v1406 = vpow.pop %v1405
  %v1407 = vadd.f32 %v1404, 1.0
  %v1408 = vadd.f32 %v1406, 1.0
  %v1409 = vrcp.pop %v1407
  %v1410 = vmul.f32 %v1407, %v1409
  %v1411 = vsub.f32 1.0, %v1410
  %v1412 = vmul.f32 %v1409, %v1411
  %v1413 = vadd.f32 %v1409, %v1412
  %vm1414 = vweird.f32 %v1407
  %vm1415 = vweird.f32 %v1409
  %vm1416 = vmor %vm1414, %vm1415
  %v1417 = vsel %vm1416, %v1409, %v1413
  %v1418 = vand.u32 2147483647, %v1407
  %vm1419 = vcmp.eq.f32.partialorder %v1418, 8.507059e+37
  %v1420 = vand.u32 %v1407, 2147483648
  %v1421 = vor.u32 1.1754944e-38, %v1420
  %v1422 = vsel %vm1419, %v1421, %v1417
  %v1423 = vmul.f32 1.0, %v1422
  %v1424 = vrcp.pop %v1408
  %v1425 = vmul.f32 %v1408, %v1424
  %v1426 = vsub.f32 1.0, %v1425
  %v1427 = vmul.f32 %v1424, %v1426
  %v1428 = vadd.f32 %v1424, %v1427
  %vm1429 = vweird.f32 %v1408
  %vm1430 = vweird.f32 %v1424
  %vm1431 = vmor %vm1429, %vm1430
  %v1432 = vsel %vm1431, %v1424, %v1428
  %v1433 = vand.u32 2147483647, %v1408
  %vm1434 = vcmp.eq.f32.partialorder %v1433, 8.507059e+37
  %v1435 = vand.u32 %v1408, 2147483648
  %v1436 = vor.u32 1.1754944e-38, %v1435
  %v1437 = vsel %vm1434, %v1436, %v1432
  %v1438 = vmul.f32 1.0, %v1437
  %v1439 = vadd.f32 %v1394, %v1063
  %v1440 = vadd.f32 %v1397, %v1063
  %v1441 = vmul.f32 %v1423, %v1439
  %v1442 = vmul.f32 %v1438, %v1440
  %v1443 = vadd.f32 %v971, %v1441
  %v1444 = vadd.f32 %v974, %v1442
  %v1445 = vtanh.pop %v1443
  %v1446 = vtanh.pop %v1444
  %v1447 = vsub.f32 1.0, %v1423
  %v1448 = vsub.f32 1.0, %v1438
  %1451 = vrot.lane.b32.xlu0 %v1445, 64
  %v1452 = vpop.permute.xlu0 %1451
  %1453 = vrot.lane.b32.xlu0 %v1446, 64
  %v1454 = vpop.permute.xlu0 %1453
  %v1457 = vmul.f32 %v1447, %v1452
  %v1458 = vmul.f32 %v1448, %v1454
  %v1459 = vmul.f32 %v1423, %v1336
  %v1460 = vmul.f32 %v1438, %v1337
  %v1461 = vadd.f32 %v1457, %v1459
  %v1462 = vadd.f32 %v1458, %v1460
  %1465 = vrot.lane.b32.xlu0 %v1461, 64
  %v1466 = vpop.permute.xlu0 %1465
  %1467 = vrot.lane.b32.xlu0 %v1462, 64
  %v1468 = vpop.permute.xlu0 %1467
  %s1471 = scalar_lea.vmem %s10, 48
  %1472 = vst.msk [vmem:[%s1471] sm:$0xff] %vm178, %v1466
  %1473 = vst.msk [vmem:[%s1471 + $0x8] sm:$0xff] %vm178, %v1468
  %1474 = vst.msk [vmem:[%s12] sm:$0xff] %vm178, %v1466
  %1475 = vst.msk [vmem:[%s12 + $0x8] sm:$0xff] %vm178, %v1468
  // Predicated region
  $region38: #{_lambda_.1} parent=0 // pred_check
    _
  $region39: #{_lambda_.1} parent=0 // pred_check_branch
    %1477 = sbr.rel (0) target = $region41
  $region40: #{_lambda_.1} parent=0 // pred_region
    _
  $region41: #{_lambda_.1} parent=0 // pred_fallthru
    _
  // Predicated region
  $region42: #{_lambda_.1} parent=0 // pred_check
    _
  $region43: #{_lambda_.1} parent=0 // pred_check_branch
    %1479 = sbr.rel (0) target = $region45
  $region44: #{_lambda_.1} parent=0 // pred_region
    _
  $region45: #{_lambda_.1} parent=0 // pred_fallthru
    _
  // Predicated region
  $region46: #{_lambda_.1} parent=0 // pred_check
    _
  $region47: #{_lambda_.1} parent=0 // pred_check_branch
    %1481 = sbr.rel (0) target = $region49
  $region48: #{_lambda_.1} parent=0 // pred_region
    _
  $region49: #{_lambda_.1} parent=0 // pred_fallthru
    _
  // Predicated region
  $region50: #{_lambda_.1} parent=0 // pred_check
    _
  $region51: #{_lambda_.1} parent=0 // pred_check_branch
    %1483 = sbr.rel (0) target = $region53
  $region52: #{_lambda_.1} parent=0 // pred_region
    _
  $region53: #{_lambda_.1} parent=0 // pred_fallthru
    _
  // Predicated region
  $region54: #{_lambda_.1} parent=0 // pred_check
    _
  $region55: #{_lambda_.1} parent=0 // pred_check_branch
    %1485 = sbr.rel (0) target = $region57
  $region56: #{_lambda_.1} parent=0 // pred_region
    _
  $region57: #{_lambda_.1} parent=0 // pred_fallthru
    _
  // Predicated region
  $region58: #{_lambda_.1} parent=0 // pred_check
    _
  $region59: #{_lambda_.1} parent=0 // pred_check_branch
    %1487 = sbr.rel (0) target = $region61
  $region60: #{_lambda_.1} parent=0 // pred_region
    _
  $region61: #{_lambda_.1} parent=0 // pred_fallthru
    _
  // Predicated region
  $region62: #{_lambda_.1} parent=0 // pred_check
    _
  $region63: #{_lambda_.1} parent=0 // pred_check_branch
    %1489 = sbr.rel (0) target = $region65
  $region64: #{_lambda_.1} parent=0 // pred_region
    _
  $region65: #{_lambda_.1} parent=0 // pred_fallthru
    _
  // Predicated region
  $region66: #{_lambda_.1} parent=0 // pred_check
    _
  $region67: #{_lambda_.1} parent=0 // pred_check_branch
    %1491 = sbr.rel (0) target = $region69
  $region68: #{_lambda_.1} parent=0 // pred_region
    _
  $region69: #{_lambda_.1} parent=0 // pred_fallthru
    _

</llo_original>
